<compile_context>
chip_gen: v7x
topology: tpu7x:2x2x1
jax: 0.10.0
libtpu: 0.0.40
codegen_flags: <defaults>
</compile_context>

<pallas_src>
import functools

import jax
import jax.numpy as jnp
from jax.experimental import pallas as pl
from jax.experimental.pallas import tpu as pltpu


# ----------------------------- math helpers --------------------------------

def _layernorm(x, gamma, beta, eps=1e-5):
    mu = jnp.mean(x, axis=-1, keepdims=True)
    var = jnp.mean((x - mu) ** 2, axis=-1, keepdims=True)
    return (x - mu) * jax.lax.rsqrt(var + eps) * gamma + beta


def _gelu_tanh(x):
    # TODO(synk): PyTorch nn.GELU defaults to the exact erf form; tanh approximation used.
    c = 0.7978845608028654  # sqrt(2/pi)
    return 0.5 * x * (1.0 + jnp.tanh(c * (x + 0.044715 * x * x * x)))


# ------------------------------ Pallas kernel ------------------------------

def _encoder_kernel(n, p, heads,
                    x_ref,
                    ln1g_ref, ln1b_ref,
                    wq_ref, wk_ref, wv_ref,
                    bq_ref, bk_ref, bv_ref,
                    wo_ref, bo_ref,
                    ln2g_ref, ln2b_ref,
                    w1_ref, b1_ref,
                    w2_ref, b2_ref,
                    o_ref):
    x = x_ref[...]                           # (R, C) float32, R = n*p flattened rows
    R, C = x.shape
    dh = C // heads
    scale = 1.0 / float(dh) ** 0.5
    bf16 = jnp.bfloat16

    # ---- MHSA sub-block (pre-norm, residual; g1 folded into wo/bo) ----------
    h1 = _layernorm(x, ln1g_ref[...], ln1b_ref[...])          # f32
    h1b = h1.astype(bf16)

    # Per-head projections over ALL rows at once (M = R fills the MXU M axis).
    # Per-head weight slabs come from Ref indexing (contiguous VMEM loads), never
    # from lane-slicing a live vreg value.
    q_heads = [jnp.dot(h1b, wq_ref[h], preferred_element_type=jnp.float32) + bq_ref[h]
               for h in range(heads)]
    k_heads = [jnp.dot(h1b, wk_ref[h], preferred_element_type=jnp.float32) + bk_ref[h]
               for h in range(heads)]
    v_heads = [jnp.dot(h1b, wv_ref[h], preferred_element_type=jnp.float32) + bv_ref[h]
               for h in range(heads)]

    # Attention is per batch item; n and heads are tiny static ints, so unroll.
    slabs = []
    for b in range(n):
        lo = b * p                           # sublane-aligned slices (p is a multiple of 8)
        slab = None
        for h in range(heads):
            qb = q_heads[h][lo:lo + p]       # (p, dh)
            kb = k_heads[h][lo:lo + p]
            vb = v_heads[h][lo:lo + p]
            s = jnp.einsum('qd,kd->qk', qb.astype(bf16), kb.astype(bf16),
                           preferred_element_type=jnp.float32) * scale       # (p, p) f32
            s = s - jnp.max(s, axis=-1, keepdims=True)
            e = jnp.exp(s)
            prob = e * pl.reciprocal(jnp.sum(e, axis=-1, keepdims=True), approx=True)
            ob = jnp.dot(prob.astype(bf16), vb.astype(bf16),
                         preferred_element_type=jnp.float32)                 # (p, dh)
            # Head merge = sum of per-head matmuls against wo[h]: no lane-axis concat.
            proj = jnp.dot(ob.astype(bf16), wo_ref[h],
                           preferred_element_type=jnp.float32)               # (p, C)
            slab = proj if slab is None else slab + proj
        slabs.append(slab)
    attn = jnp.concatenate(slabs, axis=0) + bo_ref[...]       # (R, C), sublane concat only
    y = x + attn                                              # g1 already folded into wo/bo

    # ---- expansion-FC sub-block (pre-norm, residual; g2 folded into w2/b2) ----
    h2 = _layernorm(y, ln2g_ref[...], ln2b_ref[...])
    m = jnp.dot(h2.astype(bf16), w1_ref[...],
                preferred_element_type=jnp.float32) + b1_ref[...]
    m = _gelu_tanh(m)
    m = jnp.dot(m.astype(bf16), w2_ref[...],
                preferred_element_type=jnp.float32) + b2_ref[...]
    # NOTE: C=32 (<128 lanes) makes this a masked partial store; relayouting to a
    # 128-lane-dense slab would need in-kernel cross-lane shuffles costing more than
    # the single store at this size.
    o_ref[...] = y + m


# ------------------------------ wrapper -------------------------------------

def transformer_encoder(x, params, heads=2):
    """x: (N, P, C) float32 -> (N, P, C) float32."""
    N, P, C = x.shape
    dh = C // heads
    f32, bf16 = jnp.float32, jnp.bfloat16

    # ---- trace-time weight preprocessing (exact; no runtime cost) ----
    wqkv = params["wqkv"]                                     # (C, 3C)
    wq, wk, wv = wqkv[:, :C], wqkv[:, C:2 * C], wqkv[:, 2 * C:]

    def per_head(w):                                          # (C, C) -> (heads, C, dh)
        return jnp.transpose(w.reshape(C, heads, dh), (1, 0, 2)).astype(bf16)

    b_all = params["bqkv"].reshape(3, heads, dh)              # q | k | v biases
    bq, bk, bv = (b_all[i][:, None, :].astype(f32) for i in range(3))   # (heads, 1, dh)

    g1 = params["g1"]
    wo_h = (params["wo"] * g1).reshape(heads, dh, C).astype(bf16)       # g1 folded in
    bo_f = (params["bo"] * g1).astype(f32)

    g2 = params["g2"]
    w1 = params["w1"].astype(bf16)
    b1 = params["b1"].astype(f32)
    w2_f = (params["w2"] * g2).astype(bf16)                             # g2 folded in
    b2_f = (params["b2"] * g2).astype(f32)

    ln1g = params["ln1_g"].astype(f32); ln1b = params["ln1_b"].astype(f32)
    ln2g = params["ln2_g"].astype(f32); ln2b = params["ln2_b"].astype(f32)

    # Flatten (N, P) -> rows so every matmul sees M = N*P.
    x2 = x.reshape(N * P, C).astype(f32)

    kernel = functools.partial(_encoder_kernel, N, P, heads)
    out2 = pl.pallas_call(
        kernel,
        out_shape=jax.ShapeDtypeStruct((N * P, C), jnp.float32),
        # Single invocation, no grid: the whole problem (a few tens of KiB) is resident
        # in VMEM, weights are DMA'd exactly once, no per-step overhead.
        compiler_params=pltpu.CompilerParams(
            vmem_limit_bytes=32 * 1024 * 1024),   # explicit budget; fits all chips incl. v7x
    )(x2, ln1g, ln1b, per_head(wq), per_head(wk), per_head(wv),
      bq, bk, bv, wo_h, bo_f, ln2g, ln2b, w1, b1, w2_f, b2_f)
    return out2.reshape(N, P, C)


# ------------------------------ params --------------------------------------

def init_params(key, c, f=2):
    ks = jax.random.split(key, 4)
    s_in = 1.0 / (c ** 0.5)
    s_hid = 1.0 / ((f * c) ** 0.5)
    return {
        # attention sub-block
        "ln1_g": jnp.ones((1, c), jnp.float32),
        "ln1_b": jnp.zeros((1, c), jnp.float32),
        "wqkv": (jax.random.normal(ks[0], (c, 3 * c), jnp.float32) * s_in),
        "bqkv": jnp.zeros((1, 3 * c), jnp.float32),
        "wo":   (jax.random.normal(ks[1], (c, c), jnp.float32) * s_in),
        "bo":   jnp.zeros((1, c), jnp.float32),
        "g1":   jnp.ones((1, c), jnp.float32),   # ScaledResidual scale (assumed init 1.0)
        # MLP sub-block
        "ln2_g": jnp.ones((1, c), jnp.float32),
        "ln2_b": jnp.zeros((1, c), jnp.float32),
        "w1":   (jax.random.normal(ks[2], (c, f * c), jnp.float32) * s_in),
        "b1":   jnp.zeros((1, f * c), jnp.float32),
        "w2":   (jax.random.normal(ks[3], (f * c, c), jnp.float32) * s_hid),
        "b2":   jnp.zeros((1, c), jnp.float32),
        "g2":   jnp.ones((1, c), jnp.float32),
    }


# ------------------------------ reference ------------------------------------

def transformer_encoder_ref(x, params, heads=2):
    HI = jax.lax.Precision.HIGHEST
    N, P, C = x.shape
    dh = C // heads

    def one(xb):
        h1 = _layernorm(xb, params["ln1_g"], params["ln1_b"])
        qkv = jnp.dot(h1, params["wqkv"], precision=HI) + params["bqkv"]
        q, k, v = qkv[:, :C], qkv[:, C:2 * C], qkv[:, 2 * C:]
        outs = []
        for h in range(heads):
            qh, kh, vh = (t[:, h * dh:(h + 1) * dh] for t in (q, k, v))
            s = jnp.dot(qh, kh.T, precision=HI) / (dh ** 0.5)
            p = jax.nn.softmax(s, axis=-1)
            outs.append(jnp.dot(p, vh, precision=HI))
        attn = jnp.dot(jnp.concatenate(outs, -1), params["wo"], precision=HI) + params["bo"]
        y = xb + params["g1"] * attn
        h2 = _layernorm(y, params["ln2_g"], params["ln2_b"])
        m = _gelu_tanh(jnp.dot(h2, params["w1"], precision=HI) + params["b1"])
        m = jnp.dot(m, params["w2"], precision=HI) + params["b2"]
        return y + params["g2"] * m

    return jax.vmap(one)(x)


# ------------------------------ main ------------------------------------------

if __name__ == "__main__":
    key = jax.random.PRNGKey(0)
    kx, kp = jax.random.split(key)

    N, P, C, HEADS, F = 2, 16, 32, 2, 2
    x = jax.random.normal(kx, (N, P, C), jnp.float32)
    params = init_params(kp, C, F)

    out = jax.block_until_ready(transformer_encoder(x, params, heads=HEADS))
    ref = transformer_encoder_ref(x, params, heads=HEADS)

    assert out.shape == (N, P, C)
    # Kernel uses bf16 MXU operands + EUP approx reciprocal; reference is f32 HIGHEST.
    assert jnp.allclose(out, ref, atol=5e-2, rtol=5e-2), "kernel/reference mismatch"
    print("KERNEL_OK")
</pallas_src>

<mosaic_0001>
module attributes {stable_mosaic.version = 11 : i64} {
  func.func @_encoder_kernel(%arg0: memref<32x32xf32, #tpu.memory_space<vmem>>, %arg1: memref<1x32xf32, #tpu.memory_space<vmem>>, %arg2: memref<1x32xf32, #tpu.memory_space<vmem>>, %arg3: memref<2x32x16xbf16, #tpu.memory_space<vmem>>, %arg4: memref<2x32x16xbf16, #tpu.memory_space<vmem>>, %arg5: memref<2x32x16xbf16, #tpu.memory_space<vmem>>, %arg6: memref<2x1x16xf32, #tpu.memory_space<vmem>>, %arg7: memref<2x1x16xf32, #tpu.memory_space<vmem>>, %arg8: memref<2x1x16xf32, #tpu.memory_space<vmem>>, %arg9: memref<2x16x32xbf16, #tpu.memory_space<vmem>>, %arg10: memref<1x32xf32, #tpu.memory_space<vmem>>, %arg11: memref<1x32xf32, #tpu.memory_space<vmem>>, %arg12: memref<1x32xf32, #tpu.memory_space<vmem>>, %arg13: memref<32x64xbf16, #tpu.memory_space<vmem>>, %arg14: memref<1x64xf32, #tpu.memory_space<vmem>>, %arg15: memref<64x32xbf16, #tpu.memory_space<vmem>>, %arg16: memref<1x32xf32, #tpu.memory_space<vmem>>, %arg17: memref<32x32xf32, #tpu.memory_space<vmem>>) attributes {dimension_semantics = [], scalar_prefetch = 0 : i64, scratch_operands = 0 : i64, tpu.core_type = #tpu.core_type<tc>} {
    %c0 = arith.constant 0 : index
    %c0_0 = arith.constant 0 : index
    %0 = vector.load %arg0[%c0, %c0_0] : memref<32x32xf32, #tpu.memory_space<vmem>>, vector<32x32xf32>
    %c0_1 = arith.constant 0 : index
    %c0_2 = arith.constant 0 : index
    %1 = vector.load %arg1[%c0_1, %c0_2] : memref<1x32xf32, #tpu.memory_space<vmem>>, vector<1x32xf32>
    %c0_3 = arith.constant 0 : index
    %c0_4 = arith.constant 0 : index
    %2 = vector.load %arg2[%c0_3, %c0_4] : memref<1x32xf32, #tpu.memory_space<vmem>>, vector<1x32xf32>
    %cst = arith.constant dense<0.000000e+00> : vector<32xf32>
    %3 = vector.multi_reduction <add>, %0, %cst [1] : vector<32x32xf32> to vector<32xf32>
    %4 = vector.shape_cast %3 : vector<32xf32> to vector<32x1xf32>
    %cst_5 = arith.constant 3.200000e+01 : f32
    %5 = vector.broadcast %cst_5 : f32 to vector<32x1xf32>
    %6 = arith.divf %4, %5 : vector<32x1xf32>
    %7 = vector.broadcast %6 : vector<32x1xf32> to vector<32x32xf32>
    %8 = arith.subf %0, %7 : vector<32x32xf32>
    %9 = arith.mulf %8, %8 : vector<32x32xf32>
    %cst_6 = arith.constant dense<0.000000e+00> : vector<32xf32>
    %10 = vector.multi_reduction <add>, %9, %cst_6 [1] : vector<32x32xf32> to vector<32xf32>
    %11 = vector.shape_cast %10 : vector<32xf32> to vector<32x1xf32>
    %cst_7 = arith.constant 3.200000e+01 : f32
    %12 = vector.broadcast %cst_7 : f32 to vector<32x1xf32>
    %13 = arith.divf %11, %12 : vector<32x1xf32>
    %14 = vector.broadcast %6 : vector<32x1xf32> to vector<32x32xf32>
    %15 = arith.subf %0, %14 : vector<32x32xf32>
    %cst_8 = arith.constant 9.99999974E-6 : f32
    %16 = vector.broadcast %cst_8 : f32 to vector<32x1xf32>
    %17 = arith.addf %13, %16 : vector<32x1xf32>
    %18 = math.rsqrt %17 : vector<32x1xf32>
    %19 = vector.broadcast %18 : vector<32x1xf32> to vector<32x32xf32>
    %20 = arith.mulf %15, %19 : vector<32x32xf32>
    %21 = vector.broadcast %1 : vector<1x32xf32> to vector<32x32xf32>
    %22 = arith.mulf %20, %21 : vector<32x32xf32>
    %23 = vector.broadcast %2 : vector<1x32xf32> to vector<32x32xf32>
    %24 = arith.addf %22, %23 : vector<32x32xf32>
    %25 = arith.truncf %24 : vector<32x32xf32> to vector<32x32xbf16>
    %c0_9 = arith.constant 0 : index
    %c0_10 = arith.constant 0 : index
    %c0_11 = arith.constant 0 : index
    %26 = vector.load %arg3[%c0_9, %c0_10, %c0_11] : memref<2x32x16xbf16, #tpu.memory_space<vmem>>, vector<1x32x16xbf16>
    %27 = vector.shape_cast %26 : vector<1x32x16xbf16> to vector<32x16xbf16>
    %cst_12 = arith.constant dense<0.000000e+00> : vector<32x16xf32>
    %28 = tpu.matmul %25, %27, %cst_12 {dimension_numbers = #tpu.dot_dimension_numbers<[1], [0], [0], [1], [0, 0, 1, 1], [], []>} : vector<32x32xbf16>, vector<32x16xbf16>, vector<32x16xf32> -> vector<32x16xf32>
    %c0_13 = arith.constant 0 : index
    %c0_14 = arith.constant 0 : index
    %c0_15 = arith.constant 0 : index
    %29 = vector.load %arg6[%c0_13, %c0_14, %c0_15] : memref<2x1x16xf32, #tpu.memory_space<vmem>>, vector<1x1x16xf32>
    %30 = vector.shape_cast %29 : vector<1x1x16xf32> to vector<1x16xf32>
    %31 = vector.broadcast %30 : vector<1x16xf32> to vector<32x16xf32>
    %32 = arith.addf %28, %31 : vector<32x16xf32>
    %c1 = arith.constant 1 : index
    %c0_16 = arith.constant 0 : index
    %c0_17 = arith.constant 0 : index
    %33 = vector.load %arg3[%c1, %c0_16, %c0_17] : memref<2x32x16xbf16, #tpu.memory_space<vmem>>, vector<1x32x16xbf16>
    %34 = vector.shape_cast %33 : vector<1x32x16xbf16> to vector<32x16xbf16>
    %cst_18 = arith.constant dense<0.000000e+00> : vector<32x16xf32>
    %35 = tpu.matmul %25, %34, %cst_18 {dimension_numbers = #tpu.dot_dimension_numbers<[1], [0], [0], [1], [0, 0, 1, 1], [], []>} : vector<32x32xbf16>, vector<32x16xbf16>, vector<32x16xf32> -> vector<32x16xf32>
    %c1_19 = arith.constant 1 : index
    %c0_20 = arith.constant 0 : index
    %c0_21 = arith.constant 0 : index
    %36 = vector.load %arg6[%c1_19, %c0_20, %c0_21] : memref<2x1x16xf32, #tpu.memory_space<vmem>>, vector<1x1x16xf32>
    %37 = vector.shape_cast %36 : vector<1x1x16xf32> to vector<1x16xf32>
    %38 = vector.broadcast %37 : vector<1x16xf32> to vector<32x16xf32>
    %39 = arith.addf %35, %38 : vector<32x16xf32>
    %c0_22 = arith.constant 0 : index
    %c0_23 = arith.constant 0 : index
    %c0_24 = arith.constant 0 : index
    %40 = vector.load %arg4[%c0_22, %c0_23, %c0_24] : memref<2x32x16xbf16, #tpu.memory_space<vmem>>, vector<1x32x16xbf16>
    %41 = vector.shape_cast %40 : vector<1x32x16xbf16> to vector<32x16xbf16>
    %cst_25 = arith.constant dense<0.000000e+00> : vector<32x16xf32>
    %42 = tpu.matmul %25, %41, %cst_25 {dimension_numbers = #tpu.dot_dimension_numbers<[1], [0], [0], [1], [0, 0, 1, 1], [], []>} : vector<32x32xbf16>, vector<32x16xbf16>, vector<32x16xf32> -> vector<32x16xf32>
    %c0_26 = arith.constant 0 : index
    %c0_27 = arith.constant 0 : index
    %c0_28 = arith.constant 0 : index
    %43 = vector.load %arg7[%c0_26, %c0_27, %c0_28] : memref<2x1x16xf32, #tpu.memory_space<vmem>>, vector<1x1x16xf32>
    %44 = vector.shape_cast %43 : vector<1x1x16xf32> to vector<1x16xf32>
    %45 = vector.broadcast %44 : vector<1x16xf32> to vector<32x16xf32>
    %46 = arith.addf %42, %45 : vector<32x16xf32>
    %c1_29 = arith.constant 1 : index
    %c0_30 = arith.constant 0 : index
    %c0_31 = arith.constant 0 : index
    %47 = vector.load %arg4[%c1_29, %c0_30, %c0_31] : memref<2x32x16xbf16, #tpu.memory_space<vmem>>, vector<1x32x16xbf16>
    %48 = vector.shape_cast %47 : vector<1x32x16xbf16> to vector<32x16xbf16>
    %cst_32 = arith.constant dense<0.000000e+00> : vector<32x16xf32>
    %49 = tpu.matmul %25, %48, %cst_32 {dimension_numbers = #tpu.dot_dimension_numbers<[1], [0], [0], [1], [0, 0, 1, 1], [], []>} : vector<32x32xbf16>, vector<32x16xbf16>, vector<32x16xf32> -> vector<32x16xf32>
    %c1_33 = arith.constant 1 : index
    %c0_34 = arith.constant 0 : index
    %c0_35 = arith.constant 0 : index
    %50 = vector.load %arg7[%c1_33, %c0_34, %c0_35] : memref<2x1x16xf32, #tpu.memory_space<vmem>>, vector<1x1x16xf32>
    %51 = vector.shape_cast %50 : vector<1x1x16xf32> to vector<1x16xf32>
    %52 = vector.broadcast %51 : vector<1x16xf32> to vector<32x16xf32>
    %53 = arith.addf %49, %52 : vector<32x16xf32>
    %c0_36 = arith.constant 0 : index
    %c0_37 = arith.constant 0 : index
    %c0_38 = arith.constant 0 : index
    %54 = vector.load %arg5[%c0_36, %c0_37, %c0_38] : memref<2x32x16xbf16, #tpu.memory_space<vmem>>, vector<1x32x16xbf16>
    %55 = vector.shape_cast %54 : vector<1x32x16xbf16> to vector<32x16xbf16>
    %cst_39 = arith.constant dense<0.000000e+00> : vector<32x16xf32>
    %56 = tpu.matmul %25, %55, %cst_39 {dimension_numbers = #tpu.dot_dimension_numbers<[1], [0], [0], [1], [0, 0, 1, 1], [], []>} : vector<32x32xbf16>, vector<32x16xbf16>, vector<32x16xf32> -> vector<32x16xf32>
    %c0_40 = arith.constant 0 : index
    %c0_41 = arith.constant 0 : index
    %c0_42 = arith.constant 0 : index
    %57 = vector.load %arg8[%c0_40, %c0_41, %c0_42] : memref<2x1x16xf32, #tpu.memory_space<vmem>>, vector<1x1x16xf32>
    %58 = vector.shape_cast %57 : vector<1x1x16xf32> to vector<1x16xf32>
    %59 = vector.broadcast %58 : vector<1x16xf32> to vector<32x16xf32>
    %60 = arith.addf %56, %59 : vector<32x16xf32>
    %c1_43 = arith.constant 1 : index
    %c0_44 = arith.constant 0 : index
    %c0_45 = arith.constant 0 : index
    %61 = vector.load %arg5[%c1_43, %c0_44, %c0_45] : memref<2x32x16xbf16, #tpu.memory_space<vmem>>, vector<1x32x16xbf16>
    %62 = vector.shape_cast %61 : vector<1x32x16xbf16> to vector<32x16xbf16>
    %cst_46 = arith.constant dense<0.000000e+00> : vector<32x16xf32>
    %63 = tpu.matmul %25, %62, %cst_46 {dimension_numbers = #tpu.dot_dimension_numbers<[1], [0], [0], [1], [0, 0, 1, 1], [], []>} : vector<32x32xbf16>, vector<32x16xbf16>, vector<32x16xf32> -> vector<32x16xf32>
    %c1_47 = arith.constant 1 : index
    %c0_48 = arith.constant 0 : index
    %c0_49 = arith.constant 0 : index
    %64 = vector.load %arg8[%c1_47, %c0_48, %c0_49] : memref<2x1x16xf32, #tpu.memory_space<vmem>>, vector<1x1x16xf32>
    %65 = vector.shape_cast %64 : vector<1x1x16xf32> to vector<1x16xf32>
    %66 = vector.broadcast %65 : vector<1x16xf32> to vector<32x16xf32>
    %67 = arith.addf %63, %66 : vector<32x16xf32>
    %68 = vector.extract_strided_slice %32 {offsets = [0, 0], sizes = [16, 16], strides = [1, 1]} : vector<32x16xf32> to vector<16x16xf32>
    %69 = vector.extract_strided_slice %46 {offsets = [0, 0], sizes = [16, 16], strides = [1, 1]} : vector<32x16xf32> to vector<16x16xf32>
    %70 = vector.extract_strided_slice %60 {offsets = [0, 0], sizes = [16, 16], strides = [1, 1]} : vector<32x16xf32> to vector<16x16xf32>
    %71 = arith.truncf %68 : vector<16x16xf32> to vector<16x16xbf16>
    %72 = arith.truncf %69 : vector<16x16xf32> to vector<16x16xbf16>
    "tpu.trace_start"() <{level = 10 : i32, message = "qd,kd->qk"}> : () -> ()
    %cst_50 = arith.constant dense<0.000000e+00> : vector<16x16xf32>
    %73 = tpu.matmul %71, %72, %cst_50 {dimension_numbers = #tpu.dot_dimension_numbers<[1], [1], [0], [0], [0, 0, 1, 0], [], []>} : vector<16x16xbf16>, vector<16x16xbf16>, vector<16x16xf32> -> vector<16x16xf32>
    "tpu.trace_stop"() : () -> ()
    %cst_51 = arith.constant 2.500000e-01 : f32
    %74 = vector.broadcast %cst_51 : f32 to vector<16x16xf32>
    %75 = arith.mulf %73, %74 : vector<16x16xf32>
    %cst_52 = arith.constant dense<0xFF800000> : vector<16xf32>
    %76 = vector.multi_reduction <maximumf>, %75, %cst_52 [1] : vector<16x16xf32> to vector<16xf32>
    %77 = vector.shape_cast %76 : vector<16xf32> to vector<16x1xf32>
    %78 = vector.broadcast %77 : vector<16x1xf32> to vector<16x16xf32>
    %79 = arith.subf %75, %78 : vector<16x16xf32>
    %80 = math.exp %79 : vector<16x16xf32>
    %cst_53 = arith.constant dense<0.000000e+00> : vector<16xf32>
    %81 = vector.multi_reduction <add>, %80, %cst_53 [1] : vector<16x16xf32> to vector<16xf32>
    %82 = vector.shape_cast %81 : vector<16xf32> to vector<16x1xf32>
    %83 = tpu.reciprocal %82 {approx = true} : vector<16x1xf32> -> vector<16x1xf32>
    %84 = vector.broadcast %83 : vector<16x1xf32> to vector<16x16xf32>
    %85 = arith.mulf %80, %84 : vector<16x16xf32>
    %86 = arith.truncf %85 : vector<16x16xf32> to vector<16x16xbf16>
    %87 = arith.truncf %70 : vector<16x16xf32> to vector<16x16xbf16>
    %cst_54 = arith.constant dense<0.000000e+00> : vector<16x16xf32>
    %88 = tpu.matmul %86, %87, %cst_54 {dimension_numbers = #tpu.dot_dimension_numbers<[1], [0], [0], [1], [0, 0, 1, 1], [], []>} : vector<16x16xbf16>, vector<16x16xbf16>, vector<16x16xf32> -> vector<16x16xf32>
    %89 = arith.truncf %88 : vector<16x16xf32> to vector<16x16xbf16>
    %c0_55 = arith.constant 0 : index
    %c0_56 = arith.constant 0 : index
    %c0_57 = arith.constant 0 : index
    %90 = vector.load %arg9[%c0_55, %c0_56, %c0_57] : memref<2x16x32xbf16, #tpu.memory_space<vmem>>, vector<1x16x32xbf16>
    %91 = vector.shape_cast %90 : vector<1x16x32xbf16> to vector<16x32xbf16>
    %cst_58 = arith.constant dense<0.000000e+00> : vector<16x32xf32>
    %92 = tpu.matmul %89, %91, %cst_58 {dimension_numbers = #tpu.dot_dimension_numbers<[1], [0], [0], [1], [0, 0, 1, 1], [], []>} : vector<16x16xbf16>, vector<16x32xbf16>, vector<16x32xf32> -> vector<16x32xf32>
    %93 = vector.extract_strided_slice %39 {offsets = [0, 0], sizes = [16, 16], strides = [1, 1]} : vector<32x16xf32> to vector<16x16xf32>
    %94 = vector.extract_strided_slice %53 {offsets = [0, 0], sizes = [16, 16], strides = [1, 1]} : vector<32x16xf32> to vector<16x16xf32>
    %95 = vector.extract_strided_slice %67 {offsets = [0, 0], sizes = [16, 16], strides = [1, 1]} : vector<32x16xf32> to vector<16x16xf32>
    %96 = arith.truncf %93 : vector<16x16xf32> to vector<16x16xbf16>
    %97 = arith.truncf %94 : vector<16x16xf32> to vector<16x16xbf16>
    "tpu.trace_start"() <{level = 10 : i32, message = "qd,kd->qk"}> : () -> ()
    %cst_59 = arith.constant dense<0.000000e+00> : vector<16x16xf32>
    %98 = tpu.matmul %96, %97, %cst_59 {dimension_numbers = #tpu.dot_dimension_numbers<[1], [1], [0], [0], [0, 0, 1, 0], [], []>} : vector<16x16xbf16>, vector<16x16xbf16>, vector<16x16xf32> -> vector<16x16xf32>
    "tpu.trace_stop"() : () -> ()
    %cst_60 = arith.constant 2.500000e-01 : f32
    %99 = vector.broadcast %cst_60 : f32 to vector<16x16xf32>
    %100 = arith.mulf %98, %99 : vector<16x16xf32>
    %cst_61 = arith.constant dense<0xFF800000> : vector<16xf32>
    %101 = vector.multi_reduction <maximumf>, %100, %cst_61 [1] : vector<16x16xf32> to vector<16xf32>
    %102 = vector.shape_cast %101 : vector<16xf32> to vector<16x1xf32>
    %103 = vector.broadcast %102 : vector<16x1xf32> to vector<16x16xf32>
    %104 = arith.subf %100, %103 : vector<16x16xf32>
    %105 = math.exp %104 : vector<16x16xf32>
    %cst_62 = arith.constant dense<0.000000e+00> : vector<16xf32>
    %106 = vector.multi_reduction <add>, %105, %cst_62 [1] : vector<16x16xf32> to vector<16xf32>
    %107 = vector.shape_cast %106 : vector<16xf32> to vector<16x1xf32>
    %108 = tpu.reciprocal %107 {approx = true} : vector<16x1xf32> -> vector<16x1xf32>
    %109 = vector.broadcast %108 : vector<16x1xf32> to vector<16x16xf32>
    %110 = arith.mulf %105, %109 : vector<16x16xf32>
    %111 = arith.truncf %110 : vector<16x16xf32> to vector<16x16xbf16>
    %112 = arith.truncf %95 : vector<16x16xf32> to vector<16x16xbf16>
    %cst_63 = arith.constant dense<0.000000e+00> : vector<16x16xf32>
    %113 = tpu.matmul %111, %112, %cst_63 {dimension_numbers = #tpu.dot_dimension_numbers<[1], [0], [0], [1], [0, 0, 1, 1], [], []>} : vector<16x16xbf16>, vector<16x16xbf16>, vector<16x16xf32> -> vector<16x16xf32>
    %114 = arith.truncf %113 : vector<16x16xf32> to vector<16x16xbf16>
    %c1_64 = arith.constant 1 : index
    %c0_65 = arith.constant 0 : index
    %c0_66 = arith.constant 0 : index
    %115 = vector.load %arg9[%c1_64, %c0_65, %c0_66] : memref<2x16x32xbf16, #tpu.memory_space<vmem>>, vector<1x16x32xbf16>
    %116 = vector.shape_cast %115 : vector<1x16x32xbf16> to vector<16x32xbf16>
    %cst_67 = arith.constant dense<0.000000e+00> : vector<16x32xf32>
    %117 = tpu.matmul %114, %116, %cst_67 {dimension_numbers = #tpu.dot_dimension_numbers<[1], [0], [0], [1], [0, 0, 1, 1], [], []>} : vector<16x16xbf16>, vector<16x32xbf16>, vector<16x32xf32> -> vector<16x32xf32>
    %118 = arith.addf %92, %117 : vector<16x32xf32>
    %119 = vector.extract_strided_slice %32 {offsets = [16, 0], sizes = [16, 16], strides = [1, 1]} : vector<32x16xf32> to vector<16x16xf32>
    %120 = vector.extract_strided_slice %46 {offsets = [16, 0], sizes = [16, 16], strides = [1, 1]} : vector<32x16xf32> to vector<16x16xf32>
    %121 = vector.extract_strided_slice %60 {offsets = [16, 0], sizes = [16, 16], strides = [1, 1]} : vector<32x16xf32> to vector<16x16xf32>
    %122 = arith.truncf %119 : vector<16x16xf32> to vector<16x16xbf16>
    %123 = arith.truncf %120 : vector<16x16xf32> to vector<16x16xbf16>
    "tpu.trace_start"() <{level = 10 : i32, message = "qd,kd->qk"}> : () -> ()
    %cst_68 = arith.constant dense<0.000000e+00> : vector<16x16xf32>
    %124 = tpu.matmul %122, %123, %cst_68 {dimension_numbers = #tpu.dot_dimension_numbers<[1], [1], [0], [0], [0, 0, 1, 0], [], []>} : vector<16x16xbf16>, vector<16x16xbf16>, vector<16x16xf32> -> vector<16x16xf32>
    "tpu.trace_stop"() : () -> ()
    %cst_69 = arith.constant 2.500000e-01 : f32
    %125 = vector.broadcast %cst_69 : f32 to vector<16x16xf32>
    %126 = arith.mulf %124, %125 : vector<16x16xf32>
    %cst_70 = arith.constant dense<0xFF800000> : vector<16xf32>
    %127 = vector.multi_reduction <maximumf>, %126, %cst_70 [1] : vector<16x16xf32> to vector<16xf32>
    %128 = vector.shape_cast %127 : vector<16xf32> to vector<16x1xf32>
    %129 = vector.broadcast %128 : vector<16x1xf32> to vector<16x16xf32>
    %130 = arith.subf %126, %129 : vector<16x16xf32>
    %131 = math.exp %130 : vector<16x16xf32>
    %cst_71 = arith.constant dense<0.000000e+00> : vector<16xf32>
    %132 = vector.multi_reduction <add>, %131, %cst_71 [1] : vector<16x16xf32> to vector<16xf32>
    %133 = vector.shape_cast %132 : vector<16xf32> to vector<16x1xf32>
    %134 = tpu.reciprocal %133 {approx = true} : vector<16x1xf32> -> vector<16x1xf32>
    %135 = vector.broadcast %134 : vector<16x1xf32> to vector<16x16xf32>
    %136 = arith.mulf %131, %135 : vector<16x16xf32>
    %137 = arith.truncf %136 : vector<16x16xf32> to vector<16x16xbf16>
    %138 = arith.truncf %121 : vector<16x16xf32> to vector<16x16xbf16>
    %cst_72 = arith.constant dense<0.000000e+00> : vector<16x16xf32>
    %139 = tpu.matmul %137, %138, %cst_72 {dimension_numbers = #tpu.dot_dimension_numbers<[1], [0], [0], [1], [0, 0, 1, 1], [], []>} : vector<16x16xbf16>, vector<16x16xbf16>, vector<16x16xf32> -> vector<16x16xf32>
    %140 = arith.truncf %139 : vector<16x16xf32> to vector<16x16xbf16>
    %c0_73 = arith.constant 0 : index
    %c0_74 = arith.constant 0 : index
    %c0_75 = arith.constant 0 : index
    %141 = vector.load %arg9[%c0_73, %c0_74, %c0_75] : memref<2x16x32xbf16, #tpu.memory_space<vmem>>, vector<1x16x32xbf16>
    %142 = vector.shape_cast %141 : vector<1x16x32xbf16> to vector<16x32xbf16>
    %cst_76 = arith.constant dense<0.000000e+00> : vector<16x32xf32>
    %143 = tpu.matmul %140, %142, %cst_76 {dimension_numbers = #tpu.dot_dimension_numbers<[1], [0], [0], [1], [0, 0, 1, 1], [], []>} : vector<16x16xbf16>, vector<16x32xbf16>, vector<16x32xf32> -> vector<16x32xf32>
    %144 = vector.extract_strided_slice %39 {offsets = [16, 0], sizes = [16, 16], strides = [1, 1]} : vector<32x16xf32> to vector<16x16xf32>
    %145 = vector.extract_strided_slice %53 {offsets = [16, 0], sizes = [16, 16], strides = [1, 1]} : vector<32x16xf32> to vector<16x16xf32>
    %146 = vector.extract_strided_slice %67 {offsets = [16, 0], sizes = [16, 16], strides = [1, 1]} : vector<32x16xf32> to vector<16x16xf32>
    %147 = arith.truncf %144 : vector<16x16xf32> to vector<16x16xbf16>
    %148 = arith.truncf %145 : vector<16x16xf32> to vector<16x16xbf16>
    "tpu.trace_start"() <{level = 10 : i32, message = "qd,kd->qk"}> : () -> ()
    %cst_77 = arith.constant dense<0.000000e+00> : vector<16x16xf32>
    %149 = tpu.matmul %147, %148, %cst_77 {dimension_numbers = #tpu.dot_dimension_numbers<[1], [1], [0], [0], [0, 0, 1, 0], [], []>} : vector<16x16xbf16>, vector<16x16xbf16>, vector<16x16xf32> -> vector<16x16xf32>
    "tpu.trace_stop"() : () -> ()
    %cst_78 = arith.constant 2.500000e-01 : f32
    %150 = vector.broadcast %cst_78 : f32 to vector<16x16xf32>
    %151 = arith.mulf %149, %150 : vector<16x16xf32>
    %cst_79 = arith.constant dense<0xFF800000> : vector<16xf32>
    %152 = vector.multi_reduction <maximumf>, %151, %cst_79 [1] : vector<16x16xf32> to vector<16xf32>
    %153 = vector.shape_cast %152 : vector<16xf32> to vector<16x1xf32>
    %154 = vector.broadcast %153 : vector<16x1xf32> to vector<16x16xf32>
    %155 = arith.subf %151, %154 : vector<16x16xf32>
    %156 = math.exp %155 : vector<16x16xf32>
    %cst_80 = arith.constant dense<0.000000e+00> : vector<16xf32>
    %157 = vector.multi_reduction <add>, %156, %cst_80 [1] : vector<16x16xf32> to vector<16xf32>
    %158 = vector.shape_cast %157 : vector<16xf32> to vector<16x1xf32>
    %159 = tpu.reciprocal %158 {approx = true} : vector<16x1xf32> -> vector<16x1xf32>
    %160 = vector.broadcast %159 : vector<16x1xf32> to vector<16x16xf32>
    %161 = arith.mulf %156, %160 : vector<16x16xf32>
    %162 = arith.truncf %161 : vector<16x16xf32> to vector<16x16xbf16>
    %163 = arith.truncf %146 : vector<16x16xf32> to vector<16x16xbf16>
    %cst_81 = arith.constant dense<0.000000e+00> : vector<16x16xf32>
    %164 = tpu.matmul %162, %163, %cst_81 {dimension_numbers = #tpu.dot_dimension_numbers<[1], [0], [0], [1], [0, 0, 1, 1], [], []>} : vector<16x16xbf16>, vector<16x16xbf16>, vector<16x16xf32> -> vector<16x16xf32>
    %165 = arith.truncf %164 : vector<16x16xf32> to vector<16x16xbf16>
    %c1_82 = arith.constant 1 : index
    %c0_83 = arith.constant 0 : index
    %c0_84 = arith.constant 0 : index
    %166 = vector.load %arg9[%c1_82, %c0_83, %c0_84] : memref<2x16x32xbf16, #tpu.memory_space<vmem>>, vector<1x16x32xbf16>
    %167 = vector.shape_cast %166 : vector<1x16x32xbf16> to vector<16x32xbf16>
    %cst_85 = arith.constant dense<0.000000e+00> : vector<16x32xf32>
    %168 = tpu.matmul %165, %167, %cst_85 {dimension_numbers = #tpu.dot_dimension_numbers<[1], [0], [0], [1], [0, 0, 1, 1], [], []>} : vector<16x16xbf16>, vector<16x32xbf16>, vector<16x32xf32> -> vector<16x32xf32>
    %169 = arith.addf %143, %168 : vector<16x32xf32>
    %170 = tpu.concatenate %118, %169 in 0 : vector<16x32xf32>, vector<16x32xf32> -> vector<32x32xf32>
    %c0_86 = arith.constant 0 : index
    %c0_87 = arith.constant 0 : index
    %171 = vector.load %arg10[%c0_86, %c0_87] : memref<1x32xf32, #tpu.memory_space<vmem>>, vector<1x32xf32>
    %172 = vector.broadcast %171 : vector<1x32xf32> to vector<32x32xf32>
    %173 = arith.addf %170, %172 : vector<32x32xf32>
    %174 = arith.addf %0, %173 : vector<32x32xf32>
    %c0_88 = arith.constant 0 : index
    %c0_89 = arith.constant 0 : index
    %175 = vector.load %arg11[%c0_88, %c0_89] : memref<1x32xf32, #tpu.memory_space<vmem>>, vector<1x32xf32>
    %c0_90 = arith.constant 0 : index
    %c0_91 = arith.constant 0 : index
    %176 = vector.load %arg12[%c0_90, %c0_91] : memref<1x32xf32, #tpu.memory_space<vmem>>, vector<1x32xf32>
    %cst_92 = arith.constant dense<0.000000e+00> : vector<32xf32>
    %177 = vector.multi_reduction <add>, %174, %cst_92 [1] : vector<32x32xf32> to vector<32xf32>
    %178 = vector.shape_cast %177 : vector<32xf32> to vector<32x1xf32>
    %cst_93 = arith.constant 3.200000e+01 : f32
    %179 = vector.broadcast %cst_93 : f32 to vector<32x1xf32>
    %180 = arith.divf %178, %179 : vector<32x1xf32>
    %181 = vector.broadcast %180 : vector<32x1xf32> to vector<32x32xf32>
    %182 = arith.subf %174, %181 : vector<32x32xf32>
    %183 = arith.mulf %182, %182 : vector<32x32xf32>
    %cst_94 = arith.constant dense<0.000000e+00> : vector<32xf32>
    %184 = vector.multi_reduction <add>, %183, %cst_94 [1] : vector<32x32xf32> to vector<32xf32>
    %185 = vector.shape_cast %184 : vector<32xf32> to vector<32x1xf32>
    %cst_95 = arith.constant 3.200000e+01 : f32
    %186 = vector.broadcast %cst_95 : f32 to vector<32x1xf32>
    %187 = arith.divf %185, %186 : vector<32x1xf32>
    %188 = vector.broadcast %180 : vector<32x1xf32> to vector<32x32xf32>
    %189 = arith.subf %174, %188 : vector<32x32xf32>
    %cst_96 = arith.constant 9.99999974E-6 : f32
    %190 = vector.broadcast %cst_96 : f32 to vector<32x1xf32>
    %191 = arith.addf %187, %190 : vector<32x1xf32>
    %192 = math.rsqrt %191 : vector<32x1xf32>
    %193 = vector.broadcast %192 : vector<32x1xf32> to vector<32x32xf32>
    %194 = arith.mulf %189, %193 : vector<32x32xf32>
    %195 = vector.broadcast %175 : vector<1x32xf32> to vector<32x32xf32>
    %196 = arith.mulf %194, %195 : vector<32x32xf32>
    %197 = vector.broadcast %176 : vector<1x32xf32> to vector<32x32xf32>
    %198 = arith.addf %196, %197 : vector<32x32xf32>
    %199 = arith.truncf %198 : vector<32x32xf32> to vector<32x32xbf16>
    %c0_97 = arith.constant 0 : index
    %c0_98 = arith.constant 0 : index
    %200 = vector.load %arg13[%c0_97, %c0_98] : memref<32x64xbf16, #tpu.memory_space<vmem>>, vector<32x64xbf16>
    %cst_99 = arith.constant dense<0.000000e+00> : vector<32x64xf32>
    %201 = tpu.matmul %199, %200, %cst_99 {dimension_numbers = #tpu.dot_dimension_numbers<[1], [0], [0], [1], [0, 0, 1, 1], [], []>} : vector<32x32xbf16>, vector<32x64xbf16>, vector<32x64xf32> -> vector<32x64xf32>
    %c0_100 = arith.constant 0 : index
    %c0_101 = arith.constant 0 : index
    %202 = vector.load %arg14[%c0_100, %c0_101] : memref<1x64xf32, #tpu.memory_space<vmem>>, vector<1x64xf32>
    %203 = vector.broadcast %202 : vector<1x64xf32> to vector<32x64xf32>
    %204 = arith.addf %201, %203 : vector<32x64xf32>
    %cst_102 = arith.constant 5.000000e-01 : f32
    %205 = vector.broadcast %cst_102 : f32 to vector<32x64xf32>
    %206 = arith.mulf %205, %204 : vector<32x64xf32>
    %cst_103 = arith.constant 4.471500e-02 : f32
    %207 = vector.broadcast %cst_103 : f32 to vector<32x64xf32>
    %208 = arith.mulf %207, %204 : vector<32x64xf32>
    %209 = arith.mulf %208, %204 : vector<32x64xf32>
    %210 = arith.mulf %209, %204 : vector<32x64xf32>
    %211 = arith.addf %204, %210 : vector<32x64xf32>
    %cst_104 = arith.constant 0.797884583 : f32
    %212 = vector.broadcast %cst_104 : f32 to vector<32x64xf32>
    %213 = arith.mulf %212, %211 : vector<32x64xf32>
    %214 = math.tanh %213 : vector<32x64xf32>
    %cst_105 = arith.constant 1.000000e+00 : f32
    %215 = vector.broadcast %cst_105 : f32 to vector<32x64xf32>
    %216 = arith.addf %215, %214 : vector<32x64xf32>
    %217 = arith.mulf %206, %216 : vector<32x64xf32>
    %218 = arith.truncf %217 : vector<32x64xf32> to vector<32x64xbf16>
    %c0_106 = arith.constant 0 : index
    %c0_107 = arith.constant 0 : index
    %219 = vector.load %arg15[%c0_106, %c0_107] : memref<64x32xbf16, #tpu.memory_space<vmem>>, vector<64x32xbf16>
    %cst_108 = arith.constant dense<0.000000e+00> : vector<32x32xf32>
    %220 = tpu.matmul %218, %219, %cst_108 {dimension_numbers = #tpu.dot_dimension_numbers<[1], [0], [0], [1], [0, 0, 1, 1], [], []>} : vector<32x64xbf16>, vector<64x32xbf16>, vector<32x32xf32> -> vector<32x32xf32>
    %c0_109 = arith.constant 0 : index
    %c0_110 = arith.constant 0 : index
    %221 = vector.load %arg16[%c0_109, %c0_110] : memref<1x32xf32, #tpu.memory_space<vmem>>, vector<1x32xf32>
    %222 = vector.broadcast %221 : vector<1x32xf32> to vector<32x32xf32>
    %223 = arith.addf %220, %222 : vector<32x32xf32>
    %224 = arith.addf %174, %223 : vector<32x32xf32>
    %c0_111 = arith.constant 0 : index
    %c0_112 = arith.constant 0 : index
    %225 = vector.load %arg17[%c0_111, %c0_112] : memref<32x32xf32, #tpu.memory_space<vmem>>, vector<32x32xf32>
    tpu.vector_store %arg17[%c0_111, %c0_112], %224 {strides = array<i32>} : memref<32x32xf32, #tpu.memory_space<vmem>>, vector<32x32xf32>,
    return
  }
}

</mosaic_0001>

<llo_original>
// kernel: tpu_custom_call.1
$region0: #{tpu_custom_call.1}
  #allocation0 [shape = 'u32[]', space=smem, size = 0x4, offset = 0x4, fixed_abs, tag = 'smem constant byte address 0x4 - core index']
  #allocation1 [shape = 'u32[144,128]{1,0:T(1,128)}', space=vmem, size = 0x12000, scoped, tag = 'internal scratch']
  %s0 = inlined_call_operand.vmem [shape: f32[32,32], index: 0, kind: input, shape index: {}]
  %s1 = inlined_call_operand.vmem [shape: f32[1,32], index: 1, kind: input, shape index: {}]
  %s2 = inlined_call_operand.vmem [shape: f32[1,32], index: 2, kind: input, shape index: {}]
  %s3 = inlined_call_operand.vmem [shape: bf16[2,32,16], index: 3, kind: input, shape index: {}]
  %s4 = inlined_call_operand.vmem [shape: bf16[2,32,16], index: 4, kind: input, shape index: {}]
  %s5 = inlined_call_operand.vmem [shape: bf16[2,32,16], index: 5, kind: input, shape index: {}]
  %s6 = inlined_call_operand.vmem [shape: f32[2,1,16], index: 6, kind: input, shape index: {}]
  %s7 = inlined_call_operand.vmem [shape: f32[2,1,16], index: 7, kind: input, shape index: {}]
  %s8 = inlined_call_operand.vmem [shape: f32[2,1,16], index: 8, kind: input, shape index: {}]
  %s9 = inlined_call_operand.vmem [shape: bf16[2,16,32], index: 9, kind: input, shape index: {}]
  %s10 = inlined_call_operand.vmem [shape: f32[1,32], index: 10, kind: input, shape index: {}]
  %s11 = inlined_call_operand.vmem [shape: f32[1,32], index: 11, kind: input, shape index: {}]
  %s12 = inlined_call_operand.vmem [shape: f32[1,32], index: 12, kind: input, shape index: {}]
  %s13 = inlined_call_operand.vmem [shape: bf16[32,64], index: 13, kind: input, shape index: {}]
  %s14 = inlined_call_operand.vmem [shape: f32[1,64], index: 14, kind: input, shape index: {}]
  %s15 = inlined_call_operand.vmem [shape: bf16[64,32], index: 15, kind: input, shape index: {}]
  %s16 = inlined_call_operand.vmem [shape: f32[1,32], index: 16, kind: input, shape index: {}]
  %s17 = inlined_call_operand.hbm [shape: f32[32,32], index: 17, kind: output, shape index: {}]
  %s18 = sld [smem:[#allocation0]]
  $region78: #{tpu_custom_call.1} parent=0
    _
  %s20 = ssub.s32 1, %s18
  %s21 = scalar_select 0, %s20, %s18
  $region1: #{tpu_custom_call.1} parent=0
    #allocation2 [shape = 'u8[16384]{0}', space=vmem, size = 0x4000, scoped, tag = 'output window, operand 0, single buffered']
    #allocation3 [shape = 's32[1]{0}', space=sflag, size = 0x4, scoped, tag = 'scoped memory for tpu_custom_call.1']
    %22 = vsyncpa [#allocation3], 0
    // Predicated region
    $region2: #{tpu_custom_call.1} parent=1 // pred_check
      _
    $region3: #{tpu_custom_call.1} parent=1 // pred_check_branch
      %24 = sbr.rel (0) target = $region5
    $region4: #{tpu_custom_call.1} parent=1 // pred_region
      _
    $region5: #{tpu_custom_call.1} parent=1 // pred_fallthru
      _
    // Predicated region
    $region6: #{tpu_custom_call.1} parent=1 // pred_check
      _
    $region7: #{tpu_custom_call.1} parent=1 // pred_check_branch
      %26 = sbr.rel (0) target = $region9
    $region8: #{tpu_custom_call.1} parent=1 // pred_region
      _
    $region9: #{tpu_custom_call.1} parent=1 // pred_fallthru
      _
    // Predicated region
    $region10: #{tpu_custom_call.1} parent=1 // pred_check
      _
    $region11: #{tpu_custom_call.1} parent=1 // pred_check_branch
      %28 = sbr.rel (0) target = $region13
    $region12: #{tpu_custom_call.1} parent=1 // pred_region
      _
    $region13: #{tpu_custom_call.1} parent=1 // pred_fallthru
      _
    // Predicated region
    $region14: #{tpu_custom_call.1} parent=1 // pred_check
      _
    $region15: #{tpu_custom_call.1} parent=1 // pred_check_branch
      %30 = sbr.rel (0) target = $region17
    $region16: #{tpu_custom_call.1} parent=1 // pred_region
      _
    $region17: #{tpu_custom_call.1} parent=1 // pred_fallthru
      _
    // Predicated region
    $region18: #{tpu_custom_call.1} parent=1 // pred_check
      _
    $region19: #{tpu_custom_call.1} parent=1 // pred_check_branch
      %32 = sbr.rel (0) target = $region21
    $region20: #{tpu_custom_call.1} parent=1 // pred_region
      _
    $region21: #{tpu_custom_call.1} parent=1 // pred_fallthru
      _
    // Predicated region
    $region22: #{tpu_custom_call.1} parent=1 // pred_check
      _
    $region23: #{tpu_custom_call.1} parent=1 // pred_check_branch
      %34 = sbr.rel (0) target = $region25
    $region24: #{tpu_custom_call.1} parent=1 // pred_region
      _
    $region25: #{tpu_custom_call.1} parent=1 // pred_fallthru
      _
    // Predicated region
    $region26: #{tpu_custom_call.1} parent=1 // pred_check
      _
    $region27: #{tpu_custom_call.1} parent=1 // pred_check_branch
      %36 = sbr.rel (0) target = $region29
    $region28: #{tpu_custom_call.1} parent=1 // pred_region
      _
    $region29: #{tpu_custom_call.1} parent=1 // pred_fallthru
      _
    // Predicated region
    $region30: #{tpu_custom_call.1} parent=1 // pred_check
      _
    $region31: #{tpu_custom_call.1} parent=1 // pred_check_branch
      %38 = sbr.rel (0) target = $region33
    $region32: #{tpu_custom_call.1} parent=1 // pred_region
      _
    $region33: #{tpu_custom_call.1} parent=1 // pred_fallthru
      _
    // Predicated region
    $region34: #{tpu_custom_call.1} parent=1 // pred_check
      _
    $region35: #{tpu_custom_call.1} parent=1 // pred_check_branch
      %40 = sbr.rel (0) target = $region37
    $region36: #{tpu_custom_call.1} parent=1 // pred_region
      _
    $region37: #{tpu_custom_call.1} parent=1 // pred_fallthru
      _
    // Predicated region
    $region38: #{tpu_custom_call.1} parent=1 // pred_check
      _
    $region39: #{tpu_custom_call.1} parent=1 // pred_check_branch
      %42 = sbr.rel (0) target = $region41
    $region40: #{tpu_custom_call.1} parent=1 // pred_region
      _
    $region41: #{tpu_custom_call.1} parent=1 // pred_fallthru
      _
    // Predicated region
    $region42: #{tpu_custom_call.1} parent=1 // pred_check
      _
    $region43: #{tpu_custom_call.1} parent=1 // pred_check_branch
      %44 = sbr.rel (0) target = $region45
    $region44: #{tpu_custom_call.1} parent=1 // pred_region
      _
    $region45: #{tpu_custom_call.1} parent=1 // pred_fallthru
      _
    // Predicated region
    $region46: #{tpu_custom_call.1} parent=1 // pred_check
      _
    $region47: #{tpu_custom_call.1} parent=1 // pred_check_branch
      %46 = sbr.rel (0) target = $region49
    $region48: #{tpu_custom_call.1} parent=1 // pred_region
      _
    $region49: #{tpu_custom_call.1} parent=1 // pred_fallthru
      _
    // Predicated region
    $region50: #{tpu_custom_call.1} parent=1 // pred_check
      _
    $region51: #{tpu_custom_call.1} parent=1 // pred_check_branch
      %48 = sbr.rel (0) target = $region53
    $region52: #{tpu_custom_call.1} parent=1 // pred_region
      _
    $region53: #{tpu_custom_call.1} parent=1 // pred_fallthru
      _
    // Predicated region
    $region54: #{tpu_custom_call.1} parent=1 // pred_check
      _
    $region55: #{tpu_custom_call.1} parent=1 // pred_check_branch
      %50 = sbr.rel (0) target = $region57
    $region56: #{tpu_custom_call.1} parent=1 // pred_region
      _
    $region57: #{tpu_custom_call.1} parent=1 // pred_fallthru
      _
    // Predicated region
    $region58: #{tpu_custom_call.1} parent=1 // pred_check
      _
    $region59: #{tpu_custom_call.1} parent=1 // pred_check_branch
      %52 = sbr.rel (0) target = $region61
    $region60: #{tpu_custom_call.1} parent=1 // pred_region
      _
    $region61: #{tpu_custom_call.1} parent=1 // pred_fallthru
      _
    // Predicated region
    $region62: #{tpu_custom_call.1} parent=1 // pred_check
      _
    $region63: #{tpu_custom_call.1} parent=1 // pred_check_branch
      %54 = sbr.rel (0) target = $region65
    $region64: #{tpu_custom_call.1} parent=1 // pred_region
      _
    $region65: #{tpu_custom_call.1} parent=1 // pred_fallthru
      _
    // Predicated region
    $region66: #{tpu_custom_call.1} parent=1 // pred_check
      _
    $region67: #{tpu_custom_call.1} parent=1 // pred_check_branch
      %56 = sbr.rel (0) target = $region69
    $region68: #{tpu_custom_call.1} parent=1 // pred_region
      _
    $region69: #{tpu_custom_call.1} parent=1 // pred_fallthru
      _
    %v58 = vld [vmem:[%s0] sm:$0xff]
    %v59 = vld [vmem:[%s0 + $0x8] sm:$0xff]
    %v60 = vld [vmem:[%s0 + $0x10] sm:$0xff]
    %v61 = vld [vmem:[%s0 + $0x18] sm:$0xff]
    %v62 = vld [vmem:[%s1] sm:$0x1]
    %v63 = vld [vmem:[%s2] sm:$0x1]
    %vm64 = vcmask 261120
    %v65 = vsel %vm64, %v58, 0.0
    %66 = vadd.xlane.f32.xlu0 %v65
    %v67 = vpop.xlane.xlu0 %66
    %v68 = vsel %vm64, %v59, 0.0
    %69 = vadd.xlane.f32.xlu0 %v68
    %v70 = vpop.xlane.xlu0 %69
    %v71 = vsel %vm64, %v60, 0.0
    %72 = vadd.xlane.f32.xlu0 %v71
    %v73 = vpop.xlane.xlu0 %72
    %v74 = vsel %vm64, %v61, 0.0
    %75 = vadd.xlane.f32.xlu0 %v74
    %v76 = vpop.xlane.xlu0 %75
    %v77 = vrcp.pop 32.0
    %v78 = vmul.f32 %v67, %v77
    %v79 = vmul.f32 %v70, %v77
    %v80 = vmul.f32 %v73, %v77
    %v81 = vmul.f32 %v76, %v77
    %v82 = vsub.f32 %v58, %v78
    %v83 = vsub.f32 %v59, %v79
    %v84 = vsub.f32 %v60, %v80
    %v85 = vsub.f32 %v61, %v81
    %v86 = vmul.f32 %v82, %v82
    %v87 = vmul.f32 %v83, %v83
    %v88 = vmul.f32 %v84, %v84
    %v89 = vmul.f32 %v85, %v85
    %v90 = vsel %vm64, %v86, 0.0
    %91 = vadd.xlane.f32.xlu0 %v90
    %v92 = vpop.xlane.xlu0 %91
    %v93 = vsel %vm64, %v87, 0.0
    %94 = vadd.xlane.f32.xlu0 %v93
    %v95 = vpop.xlane.xlu0 %94
    %v96 = vsel %vm64, %v88, 0.0
    %97 = vadd.xlane.f32.xlu0 %v96
    %v98 = vpop.xlane.xlu0 %97
    %v99 = vsel %vm64, %v89, 0.0
    %100 = vadd.xlane.f32.xlu0 %v99
    %v101 = vpop.xlane.xlu0 %100
    %v102 = vmul.f32 %v92, %v77
    %v103 = vmul.f32 %v95, %v77
    %v104 = vmul.f32 %v98, %v77
    %v105 = vmul.f32 %v101, %v77
    %v106 = vadd.f32 %v102, 1e-05
    %v107 = vadd.f32 %v103, 1e-05
    %v108 = vadd.f32 %v104, 1e-05
    %v109 = vadd.f32 %v105, 1e-05
    %v110 = vrsqrt.pop %v106
    %v111 = vrsqrt.pop %v107
    %v112 = vrsqrt.pop %v108
    %v113 = vrsqrt.pop %v109
    %v114 = vmul.f32 %v82, %v110
    %v115 = vmul.f32 %v83, %v111
    %v116 = vmul.f32 %v84, %v112
    %v117 = vmul.f32 %v85, %v113
    %v119 = vlaneseq
    %v120 = vshrl.u32 %v119, 7
    %v121 = vsub.s32 0, %v120
    %v122 = vrot.slane %v62, %v121
    %v124 = vmul.f32 %v114, %v122
    %v125 = vmul.f32 %v115, %v122
    %v126 = vmul.f32 %v116, %v122
    %v127 = vmul.f32 %v117, %v122
    %v129 = vlaneseq
    %v130 = vshrl.u32 %v129, 7
    %v131 = vsub.s32 0, %v130
    %v132 = vrot.slane %v63, %v131
    %v134 = vadd.f32 %v124, %v132
    %v135 = vadd.f32 %v125, %v132
    %v136 = vadd.f32 %v126, %v132
    %v137 = vadd.f32 %v127, %v132
    %v138 = vpack.c.bf16 %v135, %v134
    %v139 = vpack.c.bf16 %v137, %v136
    %v140 = vld [vmem:[%s3] sm:$0xf]
    %v141 = vld [vmem:[%s3 + $0x4] sm:$0xf]
    %v142 = vld [vmem:[%s3 + $0x8] sm:$0xf]
    %v143 = vld [vmem:[%s3 + $0xc] sm:$0xf]
    %v144 = vld [vmem:[%s6] sm:$0x1]
    %v146 = vlaneseq
    %v147 = vshrl.u32 %v146, 7
    %v148 = vsub.s32 0, %v147
    %v149 = vrot.slane %v144, %v148
    %v155 = vunpack.c.l.b16 %v140
    %v156 = vunpack.c.l.b16 %v141
    %v157 = vunpack.c.l.b16 %v142
    %v158 = vunpack.c.l.b16 %v143
    %v159 = vpack.c.b16 %v156, %v155
    %v160 = vpack.c.b16 %v158, %v157
    %v164 = vsel %vm64, %v138, 0
    %v167 = vsel %vm64, %v139, 0
    %169 = vmatprep.subr.bf16.mxu0 0
    %170 = vmatpush1.bf16.msra.mxu0 %v159
    %171 = vmatprep.subr.bf16.mxu0 0
    %172 = vmatpush1.bf16.msra.mxu0 %v160
    %173 = vmatprep.subr.bf16.mxu0 0
    %174 = vmatpush1.bf16.msra.mxu0 0
    %175 = vmatprep.subr.bf16.mxu0 0
    %176 = vmatpush1.bf16.msra.mxu0 0
    %177 = vmatprep.subr.bf16.mxu0 0
    %178 = vmatpush1.bf16.msra.mxu0 0
    %179 = vmatprep.subr.bf16.mxu0 0
    %180 = vmatpush1.bf16.msra.mxu0 0
    %181 = vmatprep.subr.bf16.mxu0 0
    %182 = vmatpush1.bf16.msra.mxu0 0
    %183 = vmatprep.subr.bf16.mxu0 0
    %184 = vmatpush1.bf16.msra.mxu0 0
    %185 = vmatprep.subr.bf16.mxu0 0
    %186 = vmatpush1.bf16.msra.mxu0 0
    %187 = vmatprep.subr.bf16.mxu0 0
    %188 = vmatpush1.bf16.msra.mxu0 0
    %189 = vmatprep.subr.bf16.mxu0 0
    %190 = vmatpush1.bf16.msra.mxu0 0
    %191 = vmatprep.subr.bf16.mxu0 0
    %192 = vmatpush1.bf16.msra.mxu0 0
    %193 = vmatprep.subr.bf16.mxu0 0
    %194 = vmatpush1.bf16.msra.mxu0 0
    %195 = vmatprep.subr.bf16.mxu0 0
    %196 = vmatpush1.bf16.msra.mxu0 0
    %197 = vmatprep.subr.bf16.mxu0 0
    %198 = vmatpush1.bf16.msra.mxu0 0
    %199 = vmatprep.subr.bf16.mxu0 0
    %200 = vmatpush1.bf16.msra.mxu0 0
    %201 = vmatprep.mubr.bf16.mxu0 0
    %202 = vmatmul.mubr.bf16.gmra.mrb[0].mxu0 %v164
    %v203 = vpop.f32.mrb[0].mxu0
    %v204 = vadd.f32 %v149, %v203
    %v205 = vpop.f32.mrb[0].mxu0
    %v206 = vpop.f32.mrb[0].mxu0
    %v207 = vadd.f32 %v149, %v206
    %v208 = vpop.f32.mrb[0].mxu0
    %209 = vmatprep.mubr.bf16.mxu0 0
    %210 = vmatmul.mubr.bf16.gmra.mrb[0].mxu0 %v167
    %v211 = vpop.f32.mrb[0].mxu0
    %v212 = vadd.f32 %v149, %v211
    %v213 = vpop.f32.mrb[0].mxu0
    %v214 = vpop.f32.mrb[0].mxu0
    %v215 = vadd.f32 %v149, %v214
    %v216 = vpop.f32.mrb[0].mxu0
    %217 = vdwg.mxu0
    %s218 = scalar_lea.vmem %s3, 16
    %v219 = vld [vmem:[%s218] sm:$0xf]
    %v220 = vld [vmem:[%s218 + $0x4] sm:$0xf]
    %v221 = vld [vmem:[%s218 + $0x8] sm:$0xf]
    %v222 = vld [vmem:[%s218 + $0xc] sm:$0xf]
    %s223 = scalar_lea.vmem %s6, 1
    %v224 = vld [vmem:[%s223] sm:$0x1]
    %v226 = vlaneseq
    %v227 = vshrl.u32 %v226, 7
    %v228 = vsub.s32 0, %v227
    %v229 = vrot.slane %v224, %v228
    %v235 = vunpack.c.l.b16 %v219
    %v236 = vunpack.c.l.b16 %v220
    %v237 = vunpack.c.l.b16 %v221
    %v238 = vunpack.c.l.b16 %v222
    %v239 = vpack.c.b16 %v236, %v235
    %v240 = vpack.c.b16 %v238, %v237
    %243 = vmatprep.subr.bf16.mxu0 0
    %244 = vmatpush1.bf16.msra.mxu0 %v239
    %245 = vmatprep.subr.bf16.mxu0 0
    %246 = vmatpush1.bf16.msra.mxu0 %v240
    %247 = vmatprep.subr.bf16.mxu0 0
    %248 = vmatpush1.bf16.msra.mxu0 0
    %249 = vmatprep.subr.bf16.mxu0 0
    %250 = vmatpush1.bf16.msra.mxu0 0
    %251 = vmatprep.subr.bf16.mxu0 0
    %252 = vmatpush1.bf16.msra.mxu0 0
    %253 = vmatprep.subr.bf16.mxu0 0
    %254 = vmatpush1.bf16.msra.mxu0 0
    %255 = vmatprep.subr.bf16.mxu0 0
    %256 = vmatpush1.bf16.msra.mxu0 0
    %257 = vmatprep.subr.bf16.mxu0 0
    %258 = vmatpush1.bf16.msra.mxu0 0
    %259 = vmatprep.subr.bf16.mxu0 0
    %260 = vmatpush1.bf16.msra.mxu0 0
    %261 = vmatprep.subr.bf16.mxu0 0
    %262 = vmatpush1.bf16.msra.mxu0 0
    %263 = vmatprep.subr.bf16.mxu0 0
    %264 = vmatpush1.bf16.msra.mxu0 0
    %265 = vmatprep.subr.bf16.mxu0 0
    %266 = vmatpush1.bf16.msra.mxu0 0
    %267 = vmatprep.subr.bf16.mxu0 0
    %268 = vmatpush1.bf16.msra.mxu0 0
    %269 = vmatprep.subr.bf16.mxu0 0
    %270 = vmatpush1.bf16.msra.mxu0 0
    %271 = vmatprep.subr.bf16.mxu0 0
    %272 = vmatpush1.bf16.msra.mxu0 0
    %273 = vmatprep.subr.bf16.mxu0 0
    %274 = vmatpush1.bf16.msra.mxu0 0
    %275 = vmatprep.mubr.bf16.mxu0 0
    %276 = vmatmul.mubr.bf16.gmra.mrb[0].mxu0 %v164
    %v277 = vpop.f32.mrb[0].mxu0
    %v278 = vadd.f32 %v229, %v277
    %v279 = vpop.f32.mrb[0].mxu0
    %v280 = vpop.f32.mrb[0].mxu0
    %v281 = vadd.f32 %v229, %v280
    %v282 = vpop.f32.mrb[0].mxu0
    %283 = vmatprep.mubr.bf16.mxu0 0
    %284 = vmatmul.mubr.bf16.gmra.mrb[0].mxu0 %v167
    %v285 = vpop.f32.mrb[0].mxu0
    %v286 = vadd.f32 %v229, %v285
    %v287 = vpop.f32.mrb[0].mxu0
    %v288 = vpop.f32.mrb[0].mxu0
    %v289 = vadd.f32 %v229, %v288
    %v290 = vpop.f32.mrb[0].mxu0
    %291 = vdwg.mxu0
    %v292 = vld [vmem:[%s4] sm:$0xf]
    %v293 = vld [vmem:[%s4 + $0x4] sm:$0xf]
    %v294 = vld [vmem:[%s4 + $0x8] sm:$0xf]
    %v295 = vld [vmem:[%s4 + $0xc] sm:$0xf]
    %v296 = vld [vmem:[%s7] sm:$0x1]
    %v298 = vlaneseq
    %v299 = vshrl.u32 %v298, 7
    %v300 = vsub.s32 0, %v299
    %v301 = vrot.slane %v296, %v300
    %v307 = vunpack.c.l.b16 %v292
    %v308 = vunpack.c.l.b16 %v293
    %v309 = vunpack.c.l.b16 %v294
    %v310 = vunpack.c.l.b16 %v295
    %v311 = vpack.c.b16 %v308, %v307
    %v312 = vpack.c.b16 %v310, %v309
    %315 = vmatprep.subr.bf16.mxu0 0
    %316 = vmatpush1.bf16.msra.mxu0 %v311
    %317 = vmatprep.subr.bf16.mxu0 0
    %318 = vmatpush1.bf16.msra.mxu0 %v312
    %319 = vmatprep.subr.bf16.mxu0 0
    %320 = vmatpush1.bf16.msra.mxu0 0
    %321 = vmatprep.subr.bf16.mxu0 0
    %322 = vmatpush1.bf16.msra.mxu0 0
    %323 = vmatprep.subr.bf16.mxu0 0
    %324 = vmatpush1.bf16.msra.mxu0 0
    %325 = vmatprep.subr.bf16.mxu0 0
    %326 = vmatpush1.bf16.msra.mxu0 0
    %327 = vmatprep.subr.bf16.mxu0 0
    %328 = vmatpush1.bf16.msra.mxu0 0
    %329 = vmatprep.subr.bf16.mxu0 0
    %330 = vmatpush1.bf16.msra.mxu0 0
    %331 = vmatprep.subr.bf16.mxu0 0
    %332 = vmatpush1.bf16.msra.mxu0 0
    %333 = vmatprep.subr.bf16.mxu0 0
    %334 = vmatpush1.bf16.msra.mxu0 0
    %335 = vmatprep.subr.bf16.mxu0 0
    %336 = vmatpush1.bf16.msra.mxu0 0
    %337 = vmatprep.subr.bf16.mxu0 0
    %338 = vmatpush1.bf16.msra.mxu0 0
    %339 = vmatprep.subr.bf16.mxu0 0
    %340 = vmatpush1.bf16.msra.mxu0 0
    %341 = vmatprep.subr.bf16.mxu0 0
    %342 = vmatpush1.bf16.msra.mxu0 0
    %343 = vmatprep.subr.bf16.mxu0 0
    %344 = vmatpush1.bf16.msra.mxu0 0
    %345 = vmatprep.subr.bf16.mxu0 0
    %346 = vmatpush1.bf16.msra.mxu0 0
    %347 = vmatprep.mubr.bf16.mxu0 0
    %348 = vmatmul.mubr.bf16.gmra.mrb[0].mxu0 %v164
    %v349 = vpop.f32.mrb[0].mxu0
    %v350 = vadd.f32 %v301, %v349
    %v351 = vpop.f32.mrb[0].mxu0
    %v352 = vpop.f32.mrb[0].mxu0
    %v353 = vadd.f32 %v301, %v352
    %v354 = vpop.f32.mrb[0].mxu0
    %355 = vmatprep.mubr.bf16.mxu0 0
    %356 = vmatmul.mubr.bf16.gmra.mrb[0].mxu0 %v167
    %v357 = vpop.f32.mrb[0].mxu0
    %v358 = vadd.f32 %v301, %v357
    %v359 = vpop.f32.mrb[0].mxu0
    %v360 = vpop.f32.mrb[0].mxu0
    %v361 = vadd.f32 %v301, %v360
    %v362 = vpop.f32.mrb[0].mxu0
    %363 = vdwg.mxu0
    %s364 = scalar_lea.vmem %s4, 16
    %v365 = vld [vmem:[%s364] sm:$0xf]
    %v366 = vld [vmem:[%s364 + $0x4] sm:$0xf]
    %v367 = vld [vmem:[%s364 + $0x8] sm:$0xf]
    %v368 = vld [vmem:[%s364 + $0xc] sm:$0xf]
    %s369 = scalar_lea.vmem %s7, 1
    %v370 = vld [vmem:[%s369] sm:$0x1]
    %v372 = vlaneseq
    %v373 = vshrl.u32 %v372, 7
    %v374 = vsub.s32 0, %v373
    %v375 = vrot.slane %v370, %v374
    %v381 = vunpack.c.l.b16 %v365
    %v382 = vunpack.c.l.b16 %v366
    %v383 = vunpack.c.l.b16 %v367
    %v384 = vunpack.c.l.b16 %v368
    %v385 = vpack.c.b16 %v382, %v381
    %v386 = vpack.c.b16 %v384, %v383
    %389 = vmatprep.subr.bf16.mxu0 0
    %390 = vmatpush1.bf16.msra.mxu0 %v385
    %391 = vmatprep.subr.bf16.mxu0 0
    %392 = vmatpush1.bf16.msra.mxu0 %v386
    %393 = vmatprep.subr.bf16.mxu0 0
    %394 = vmatpush1.bf16.msra.mxu0 0
    %395 = vmatprep.subr.bf16.mxu0 0
    %396 = vmatpush1.bf16.msra.mxu0 0
    %397 = vmatprep.subr.bf16.mxu0 0
    %398 = vmatpush1.bf16.msra.mxu0 0
    %399 = vmatprep.subr.bf16.mxu0 0
    %400 = vmatpush1.bf16.msra.mxu0 0
    %401 = vmatprep.subr.bf16.mxu0 0
    %402 = vmatpush1.bf16.msra.mxu0 0
    %403 = vmatprep.subr.bf16.mxu0 0
    %404 = vmatpush1.bf16.msra.mxu0 0
    %405 = vmatprep.subr.bf16.mxu0 0
    %406 = vmatpush1.bf16.msra.mxu0 0
    %407 = vmatprep.subr.bf16.mxu0 0
    %408 = vmatpush1.bf16.msra.mxu0 0
    %409 = vmatprep.subr.bf16.mxu0 0
    %410 = vmatpush1.bf16.msra.mxu0 0
    %411 = vmatprep.subr.bf16.mxu0 0
    %412 = vmatpush1.bf16.msra.mxu0 0
    %413 = vmatprep.subr.bf16.mxu0 0
    %414 = vmatpush1.bf16.msra.mxu0 0
    %415 = vmatprep.subr.bf16.mxu0 0
    %416 = vmatpush1.bf16.msra.mxu0 0
    %417 = vmatprep.subr.bf16.mxu0 0
    %418 = vmatpush1.bf16.msra.mxu0 0
    %419 = vmatprep.subr.bf16.mxu0 0
    %420 = vmatpush1.bf16.msra.mxu0 0
    %421 = vmatprep.mubr.bf16.mxu0 0
    %422 = vmatmul.mubr.bf16.gmra.mrb[0].mxu0 %v164
    %v423 = vpop.f32.mrb[0].mxu0
    %v424 = vadd.f32 %v375, %v423
    %v425 = vpop.f32.mrb[0].mxu0
    %v426 = vpop.f32.mrb[0].mxu0
    %v427 = vadd.f32 %v375, %v426
    %v428 = vpop.f32.mrb[0].mxu0
    %429 = vmatprep.mubr.bf16.mxu0 0
    %430 = vmatmul.mubr.bf16.gmra.mrb[0].mxu0 %v167
    %v431 = vpop.f32.mrb[0].mxu0
    %v432 = vadd.f32 %v375, %v431
    %v433 = vpop.f32.mrb[0].mxu0
    %v434 = vpop.f32.mrb[0].mxu0
    %v435 = vadd.f32 %v375, %v434
    %v436 = vpop.f32.mrb[0].mxu0
    %437 = vdwg.mxu0
    %v438 = vld [vmem:[%s5] sm:$0xf]
    %v439 = vld [vmem:[%s5 + $0x4] sm:$0xf]
    %v440 = vld [vmem:[%s5 + $0x8] sm:$0xf]
    %v441 = vld [vmem:[%s5 + $0xc] sm:$0xf]
    %v442 = vld [vmem:[%s8] sm:$0x1]
    %v444 = vlaneseq
    %v445 = vshrl.u32 %v444, 7
    %v446 = vsub.s32 0, %v445
    %v447 = vrot.slane %v442, %v446
    %v453 = vunpack.c.l.b16 %v438
    %v454 = vunpack.c.l.b16 %v439
    %v455 = vunpack.c.l.b16 %v440
    %v456 = vunpack.c.l.b16 %v441
    %v457 = vpack.c.b16 %v454, %v453
    %v458 = vpack.c.b16 %v456, %v455
    %461 = vmatprep.subr.bf16.mxu0 0
    %462 = vmatpush1.bf16.msra.mxu0 %v457
    %463 = vmatprep.subr.bf16.mxu0 0
    %464 = vmatpush1.bf16.msra.mxu0 %v458
    %465 = vmatprep.subr.bf16.mxu0 0
    %466 = vmatpush1.bf16.msra.mxu0 0
    %467 = vmatprep.subr.bf16.mxu0 0
    %468 = vmatpush1.bf16.msra.mxu0 0
    %469 = vmatprep.subr.bf16.mxu0 0
    %470 = vmatpush1.bf16.msra.mxu0 0
    %471 = vmatprep.subr.bf16.mxu0 0
    %472 = vmatpush1.bf16.msra.mxu0 0
    %473 = vmatprep.subr.bf16.mxu0 0
    %474 = vmatpush1.bf16.msra.mxu0 0
    %475 = vmatprep.subr.bf16.mxu0 0
    %476 = vmatpush1.bf16.msra.mxu0 0
    %477 = vmatprep.subr.bf16.mxu0 0
    %478 = vmatpush1.bf16.msra.mxu0 0
    %479 = vmatprep.subr.bf16.mxu0 0
    %480 = vmatpush1.bf16.msra.mxu0 0
    %481 = vmatprep.subr.bf16.mxu0 0
    %482 = vmatpush1.bf16.msra.mxu0 0
    %483 = vmatprep.subr.bf16.mxu0 0
    %484 = vmatpush1.bf16.msra.mxu0 0
    %485 = vmatprep.subr.bf16.mxu0 0
    %486 = vmatpush1.bf16.msra.mxu0 0
    %487 = vmatprep.subr.bf16.mxu0 0
    %488 = vmatpush1.bf16.msra.mxu0 0
    %489 = vmatprep.subr.bf16.mxu0 0
    %490 = vmatpush1.bf16.msra.mxu0 0
    %491 = vmatprep.subr.bf16.mxu0 0
    %492 = vmatpush1.bf16.msra.mxu0 0
    %493 = vmatprep.mubr.bf16.mxu0 0
    %494 = vmatmul.mubr.bf16.gmra.mrb[0].mxu0 %v164
    %v495 = vpop.f32.mrb[0].mxu0
    %v496 = vadd.f32 %v447, %v495
    %v497 = vpop.f32.mrb[0].mxu0
    %v498 = vpop.f32.mrb[0].mxu0
    %v499 = vadd.f32 %v447, %v498
    %v500 = vpop.f32.mrb[0].mxu0
    %501 = vmatprep.mubr.bf16.mxu0 0
    %502 = vmatmul.mubr.bf16.gmra.mrb[0].mxu0 %v167
    %v503 = vpop.f32.mrb[0].mxu0
    %v504 = vadd.f32 %v447, %v503
    %v505 = vpop.f32.mrb[0].mxu0
    %v506 = vpop.f32.mrb[0].mxu0
    %v507 = vadd.f32 %v447, %v506
    %v508 = vpop.f32.mrb[0].mxu0
    %509 = vdwg.mxu0
    %s510 = scalar_lea.vmem %s5, 16
    %v511 = vld [vmem:[%s510] sm:$0xf]
    %v512 = vld [vmem:[%s510 + $0x4] sm:$0xf]
    %v513 = vld [vmem:[%s510 + $0x8] sm:$0xf]
    %v514 = vld [vmem:[%s510 + $0xc] sm:$0xf]
    %s515 = scalar_lea.vmem %s8, 1
    %v516 = vld [vmem:[%s515] sm:$0x1]
    %v518 = vlaneseq
    %v519 = vshrl.u32 %v518, 7
    %v520 = vsub.s32 0, %v519
    %v521 = vrot.slane %v516, %v520
    %v527 = vunpack.c.l.b16 %v511
    %v528 = vunpack.c.l.b16 %v512
    %v529 = vunpack.c.l.b16 %v513
    %v530 = vunpack.c.l.b16 %v514
    %v531 = vpack.c.b16 %v528, %v527
    %v532 = vpack.c.b16 %v530, %v529
    %535 = vmatprep.subr.bf16.mxu0 0
    %536 = vmatpush1.bf16.msra.mxu0 %v531
    %537 = vmatprep.subr.bf16.mxu0 0
    %538 = vmatpush1.bf16.msra.mxu0 %v532
    %539 = vmatprep.subr.bf16.mxu0 0
    %540 = vmatpush1.bf16.msra.mxu0 0
    %541 = vmatprep.subr.bf16.mxu0 0
    %542 = vmatpush1.bf16.msra.mxu0 0
    %543 = vmatprep.subr.bf16.mxu0 0
    %544 = vmatpush1.bf16.msra.mxu0 0
    %545 = vmatprep.subr.bf16.mxu0 0
    %546 = vmatpush1.bf16.msra.mxu0 0
    %547 = vmatprep.subr.bf16.mxu0 0
    %548 = vmatpush1.bf16.msra.mxu0 0
    %549 = vmatprep.subr.bf16.mxu0 0
    %550 = vmatpush1.bf16.msra.mxu0 0
    %551 = vmatprep.subr.bf16.mxu0 0
    %552 = vmatpush1.bf16.msra.mxu0 0
    %553 = vmatprep.subr.bf16.mxu0 0
    %554 = vmatpush1.bf16.msra.mxu0 0
    %555 = vmatprep.subr.bf16.mxu0 0
    %556 = vmatpush1.bf16.msra.mxu0 0
    %557 = vmatprep.subr.bf16.mxu0 0
    %558 = vmatpush1.bf16.msra.mxu0 0
    %559 = vmatprep.subr.bf16.mxu0 0
    %560 = vmatpush1.bf16.msra.mxu0 0
    %561 = vmatprep.subr.bf16.mxu0 0
    %562 = vmatpush1.bf16.msra.mxu0 0
    %563 = vmatprep.subr.bf16.mxu0 0
    %564 = vmatpush1.bf16.msra.mxu0 0
    %565 = vmatprep.subr.bf16.mxu0 0
    %566 = vmatpush1.bf16.msra.mxu0 0
    %567 = vmatprep.mubr.bf16.mxu0 0
    %568 = vmatmul.mubr.bf16.gmra.mrb[0].mxu0 %v164
    %v569 = vpop.f32.mrb[0].mxu0
    %v570 = vadd.f32 %v521, %v569
    %v571 = vpop.f32.mrb[0].mxu0
    %v572 = vpop.f32.mrb[0].mxu0
    %v573 = vadd.f32 %v521, %v572
    %v574 = vpop.f32.mrb[0].mxu0
    %575 = vmatprep.mubr.bf16.mxu0 0
    %576 = vmatmul.mubr.bf16.gmra.mrb[0].mxu0 %v167
    %v577 = vpop.f32.mrb[0].mxu0
    %v578 = vadd.f32 %v521, %v577
    %v579 = vpop.f32.mrb[0].mxu0
    %v580 = vpop.f32.mrb[0].mxu0
    %v581 = vadd.f32 %v521, %v580
    %v582 = vpop.f32.mrb[0].mxu0
    %583 = vdwg.mxu0
    %v584 = vpack.c.bf16 %v207, %v204
    %v585 = vpack.c.bf16 %v353, %v350
    %vm586 = vcmask 130048
    %v588 = vsel %vm586, %v584, 0
    %v591 = vsel %vm586, %v585, 0
    %593 = vmatprep.subr.bf16.mxu0 0
    %594 = vmatpush1.bf16.xpose.msra.mxu0 %v591
    %595 = vmatprep.subr.bf16.mxu0 0
    %596 = vmatpush1.bf16.xpose.msra.mxu0 0
    %597 = vmatprep.subr.bf16.mxu0 0
    %598 = vmatpush1.bf16.xpose.msra.mxu0 0
    %599 = vmatprep.subr.bf16.mxu0 0
    %600 = vmatpush1.bf16.xpose.msra.mxu0 0
    %601 = vmatprep.subr.bf16.mxu0 0
    %602 = vmatpush1.bf16.xpose.msra.mxu0 0
    %603 = vmatprep.subr.bf16.mxu0 0
    %604 = vmatpush1.bf16.xpose.msra.mxu0 0
    %605 = vmatprep.subr.bf16.mxu0 0
    %606 = vmatpush1.bf16.xpose.msra.mxu0 0
    %607 = vmatprep.subr.bf16.mxu0 0
    %608 = vmatpush1.bf16.xpose.msra.mxu0 0
    %609 = vmatprep.subr.bf16.mxu0 0
    %610 = vmatpush1.bf16.xpose.msra.mxu0 0
    %611 = vmatprep.subr.bf16.mxu0 0
    %612 = vmatpush1.bf16.xpose.msra.mxu0 0
    %613 = vmatprep.subr.bf16.mxu0 0
    %614 = vmatpush1.bf16.xpose.msra.mxu0 0
    %615 = vmatprep.subr.bf16.mxu0 0
    %616 = vmatpush1.bf16.xpose.msra.mxu0 0
    %617 = vmatprep.subr.bf16.mxu0 0
    %618 = vmatpush1.bf16.xpose.msra.mxu0 0
    %619 = vmatprep.subr.bf16.mxu0 0
    %620 = vmatpush1.bf16.xpose.msra.mxu0 0
    %621 = vmatprep.subr.bf16.mxu0 0
    %622 = vmatpush1.bf16.xpose.msra.mxu0 0
    %623 = vmatprep.subr.bf16.mxu0 0
    %624 = vmatpush1.bf16.xpose.msra.mxu0 0
    %625 = vmatprep.mubr.bf16.mxu0 0
    %626 = vmatmul.mubr.bf16.gmra.mrb[0].mxu0 %v588
    %v627 = vpop.f32.mrb[0].mxu0
    %v628 = vadd.f32 0.0, %v627
    %v629 = vpop.f32.mrb[0].mxu0
    %v630 = vpop.f32.mrb[0].mxu0
    %v631 = vadd.f32 0.0, %v630
    %v632 = vpop.f32.mrb[0].mxu0
    %633 = vdwg.mxu0
    %v634 = vmul.f32 %v628, 0.25
    %v635 = vmul.f32 %v631, 0.25
    %v636 = vsel %vm586, %v634, -inf
    %637 = vmax.xlane.f32.xlu0 %v636
    %v638 = vpop.xlane.xlu0 %637
    %v639 = vsel %vm586, %v635, -inf
    %640 = vmax.xlane.f32.xlu0 %v639
    %v641 = vpop.xlane.xlu0 %640
    %v642 = vsub.f32 %v634, %v638
    %v643 = vsub.f32 %v635, %v641
    %v644 = vmul.f32 %v642, 1.442695
    %v645 = vpow.pop %v644
    %v646 = vmul.f32 %v643, 1.442695
    %v647 = vpow.pop %v646
    %v648 = vsel %vm586, %v645, 0.0
    %649 = vadd.xlane.f32.xlu0 %v648
    %v650 = vpop.xlane.xlu0 %649
    %v651 = vsel %vm586, %v647, 0.0
    %652 = vadd.xlane.f32.xlu0 %v651
    %v653 = vpop.xlane.xlu0 %652
    %v654 = vrcp.pop %v650
    %v655 = vrcp.pop %v653
    %v656 = vmul.f32 %v645, %v654
    %v657 = vmul.f32 %v647, %v655
    %v658 = vpack.c.bf16 %v657, %v656
    %v659 = vpack.c.bf16 %v499, %v496
    %v661 = vsel %vm586, %v658, 0
    %663 = vmatprep.subr.bf16.mxu0 0
    %664 = vmatpush1.bf16.msra.mxu0 %v659
    %665 = vmatprep.subr.bf16.mxu0 0
    %666 = vmatpush1.bf16.msra.mxu0 0
    %667 = vmatprep.subr.bf16.mxu0 0
    %668 = vmatpush1.bf16.msra.mxu0 0
    %669 = vmatprep.subr.bf16.mxu0 0
    %670 = vmatpush1.bf16.msra.mxu0 0
    %671 = vmatprep.subr.bf16.mxu0 0
    %672 = vmatpush1.bf16.msra.mxu0 0
    %673 = vmatprep.subr.bf16.mxu0 0
    %674 = vmatpush1.bf16.msra.mxu0 0
    %675 = vmatprep.subr.bf16.mxu0 0
    %676 = vmatpush1.bf16.msra.mxu0 0
    %677 = vmatprep.subr.bf16.mxu0 0
    %678 = vmatpush1.bf16.msra.mxu0 0
    %679 = vmatprep.subr.bf16.mxu0 0
    %680 = vmatpush1.bf16.msra.mxu0 0
    %681 = vmatprep.subr.bf16.mxu0 0
    %682 = vmatpush1.bf16.msra.mxu0 0
    %683 = vmatprep.subr.bf16.mxu0 0
    %684 = vmatpush1.bf16.msra.mxu0 0
    %685 = vmatprep.subr.bf16.mxu0 0
    %686 = vmatpush1.bf16.msra.mxu0 0
    %687 = vmatprep.subr.bf16.mxu0 0
    %688 = vmatpush1.bf16.msra.mxu0 0
    %689 = vmatprep.subr.bf16.mxu0 0
    %690 = vmatpush1.bf16.msra.mxu0 0
    %691 = vmatprep.subr.bf16.mxu0 0
    %692 = vmatpush1.bf16.msra.mxu0 0
    %693 = vmatprep.subr.bf16.mxu0 0
    %694 = vmatpush1.bf16.msra.mxu0 0
    %695 = vmatprep.mubr.bf16.mxu0 0
    %696 = vmatmul.mubr.bf16.gmra.mrb[0].mxu0 %v661
    %v697 = vpop.f32.mrb[0].mxu0
    %v698 = vadd.f32 0.0, %v697
    %v699 = vpop.f32.mrb[0].mxu0
    %v700 = vpop.f32.mrb[0].mxu0
    %v701 = vadd.f32 0.0, %v700
    %v702 = vpop.f32.mrb[0].mxu0
    %703 = vdwg.mxu0
    %v704 = vpack.c.bf16 %v701, %v698
    %v705 = vld [vmem:[%s9] sm:$0xf]
    %v706 = vld [vmem:[%s9 + $0x4] sm:$0xf]
    %v707 = vpack.c.bf16 %v281, %v278
    %v708 = vpack.c.bf16 %v427, %v424
    %v710 = vsel %vm586, %v707, 0
    %v713 = vsel %vm586, %v708, 0
    %715 = vmatprep.subr.bf16.mxu0 0
    %716 = vmatpush1.bf16.xpose.msra.mxu0 %v713
    %717 = vmatprep.subr.bf16.mxu0 0
    %718 = vmatpush1.bf16.xpose.msra.mxu0 0
    %719 = vmatprep.subr.bf16.mxu0 0
    %720 = vmatpush1.bf16.xpose.msra.mxu0 0
    %721 = vmatprep.subr.bf16.mxu0 0
    %722 = vmatpush1.bf16.xpose.msra.mxu0 0
    %723 = vmatprep.subr.bf16.mxu0 0
    %724 = vmatpush1.bf16.xpose.msra.mxu0 0
    %725 = vmatprep.subr.bf16.mxu0 0
    %726 = vmatpush1.bf16.xpose.msra.mxu0 0
    %727 = vmatprep.subr.bf16.mxu0 0
    %728 = vmatpush1.bf16.xpose.msra.mxu0 0
    %729 = vmatprep.subr.bf16.mxu0 0
    %730 = vmatpush1.bf16.xpose.msra.mxu0 0
    %731 = vmatprep.subr.bf16.mxu0 0
    %732 = vmatpush1.bf16.xpose.msra.mxu0 0
    %733 = vmatprep.subr.bf16.mxu0 0
    %734 = vmatpush1.bf16.xpose.msra.mxu0 0
    %735 = vmatprep.subr.bf16.mxu0 0
    %736 = vmatpush1.bf16.xpose.msra.mxu0 0
    %737 = vmatprep.subr.bf16.mxu0 0
    %738 = vmatpush1.bf16.xpose.msra.mxu0 0
    %739 = vmatprep.subr.bf16.mxu0 0
    %740 = vmatpush1.bf16.xpose.msra.mxu0 0
    %741 = vmatprep.subr.bf16.mxu0 0
    %742 = vmatpush1.bf16.xpose.msra.mxu0 0
    %743 = vmatprep.subr.bf16.mxu0 0
    %744 = vmatpush1.bf16.xpose.msra.mxu0 0
    %745 = vmatprep.subr.bf16.mxu0 0
    %746 = vmatpush1.bf16.xpose.msra.mxu0 0
    %747 = vmatprep.mubr.bf16.mxu0 0
    %748 = vmatmul.mubr.bf16.gmra.mrb[0].mxu0 %v710
    %v749 = vpop.f32.mrb[0].mxu0
    %v750 = vadd.f32 0.0, %v749
    %v751 = vpop.f32.mrb[0].mxu0
    %v752 = vpop.f32.mrb[0].mxu0
    %v753 = vadd.f32 0.0, %v752
    %v754 = vpop.f32.mrb[0].mxu0
    %755 = vdwg.mxu0
    %v756 = vmul.f32 %v750, 0.25
    %v757 = vmul.f32 %v753, 0.25
    %v758 = vsel %vm586, %v756, -inf
    %759 = vmax.xlane.f32.xlu0 %v758
    %v760 = vpop.xlane.xlu0 %759
    %v761 = vsel %vm586, %v757, -inf
    %762 = vmax.xlane.f32.xlu0 %v761
    %v763 = vpop.xlane.xlu0 %762
    %v764 = vsub.f32 %v756, %v760
    %v765 = vsub.f32 %v757, %v763
    %v766 = vmul.f32 %v764, 1.442695
    %v767 = vpow.pop %v766
    %v768 = vmul.f32 %v765, 1.442695
    %v769 = vpow.pop %v768
    %v770 = vsel %vm586, %v767, 0.0
    %771 = vadd.xlane.f32.xlu0 %v770
    %v772 = vpop.xlane.xlu0 %771
    %v773 = vsel %vm586, %v769, 0.0
    %774 = vadd.xlane.f32.xlu0 %v773
    %v775 = vpop.xlane.xlu0 %774
    %v776 = vrcp.pop %v772
    %v777 = vrcp.pop %v775
    %v778 = vmul.f32 %v767, %v776
    %v779 = vmul.f32 %v769, %v777
    %v780 = vpack.c.bf16 %v779, %v778
    %v781 = vpack.c.bf16 %v573, %v570
    %v783 = vsel %vm586, %v780, 0
    %785 = vmatprep.subr.bf16.mxu0 0
    %786 = vmatpush1.bf16.msra.mxu0 %v781
    %787 = vmatprep.subr.bf16.mxu0 0
    %788 = vmatpush1.bf16.msra.mxu0 0
    %789 = vmatprep.subr.bf16.mxu0 0
    %790 = vmatpush1.bf16.msra.mxu0 0
    %791 = vmatprep.subr.bf16.mxu0 0
    %792 = vmatpush1.bf16.msra.mxu0 0
    %793 = vmatprep.subr.bf16.mxu0 0
    %794 = vmatpush1.bf16.msra.mxu0 0
    %795 = vmatprep.subr.bf16.mxu0 0
    %796 = vmatpush1.bf16.msra.mxu0 0
    %797 = vmatprep.subr.bf16.mxu0 0
    %798 = vmatpush1.bf16.msra.mxu0 0
    %799 = vmatprep.subr.bf16.mxu0 0
    %800 = vmatpush1.bf16.msra.mxu0 0
    %801 = vmatprep.subr.bf16.mxu0 0
    %802 = vmatpush1.bf16.msra.mxu0 0
    %803 = vmatprep.subr.bf16.mxu0 0
    %804 = vmatpush1.bf16.msra.mxu0 0
    %805 = vmatprep.subr.bf16.mxu0 0
    %806 = vmatpush1.bf16.msra.mxu0 0
    %807 = vmatprep.subr.bf16.mxu0 0
    %808 = vmatpush1.bf16.msra.mxu0 0
    %809 = vmatprep.subr.bf16.mxu0 0
    %810 = vmatpush1.bf16.msra.mxu0 0
    %811 = vmatprep.subr.bf16.mxu0 0
    %812 = vmatpush1.bf16.msra.mxu0 0
    %813 = vmatprep.subr.bf16.mxu0 0
    %814 = vmatpush1.bf16.msra.mxu0 0
    %815 = vmatprep.subr.bf16.mxu0 0
    %816 = vmatpush1.bf16.msra.mxu0 0
    %817 = vmatprep.mubr.bf16.mxu0 0
    %818 = vmatmul.mubr.bf16.gmra.mrb[0].mxu0 %v783
    %v819 = vpop.f32.mrb[0].mxu0
    %v820 = vadd.f32 0.0, %v819
    %v821 = vpop.f32.mrb[0].mxu0
    %v822 = vpop.f32.mrb[0].mxu0
    %v823 = vadd.f32 0.0, %v822
    %v824 = vpop.f32.mrb[0].mxu0
    %825 = vdwg.mxu0
    %v826 = vpack.c.bf16 %v823, %v820
    %s827 = scalar_lea.vmem %s9, 8
    %v828 = vld [vmem:[%s827] sm:$0xf]
    %v829 = vld [vmem:[%s827 + $0x4] sm:$0xf]
    %v832 = vunpack.c.l.b16 %v828
    %v833 = vunpack.c.l.b16 %v829
    %v834 = vpack.c.b16 %v833, %v832
    %v837 = vsel %vm586, %v826, 0
    %839 = vmatprep.subr.bf16.mxu0 0
    %840 = vmatpush1.bf16.msra.mxu0 %v834
    %841 = vmatprep.subr.bf16.mxu0 0
    %842 = vmatpush1.bf16.msra.mxu0 0
    %843 = vmatprep.subr.bf16.mxu0 0
    %844 = vmatpush1.bf16.msra.mxu0 0
    %845 = vmatprep.subr.bf16.mxu0 0
    %846 = vmatpush1.bf16.msra.mxu0 0
    %847 = vmatprep.subr.bf16.mxu0 0
    %848 = vmatpush1.bf16.msra.mxu0 0
    %849 = vmatprep.subr.bf16.mxu0 0
    %850 = vmatpush1.bf16.msra.mxu0 0
    %851 = vmatprep.subr.bf16.mxu0 0
    %852 = vmatpush1.bf16.msra.mxu0 0
    %853 = vmatprep.subr.bf16.mxu0 0
    %854 = vmatpush1.bf16.msra.mxu0 0
    %855 = vmatprep.subr.bf16.mxu0 0
    %856 = vmatpush1.bf16.msra.mxu0 0
    %857 = vmatprep.subr.bf16.mxu0 0
    %858 = vmatpush1.bf16.msra.mxu0 0
    %859 = vmatprep.subr.bf16.mxu0 0
    %860 = vmatpush1.bf16.msra.mxu0 0
    %861 = vmatprep.subr.bf16.mxu0 0
    %862 = vmatpush1.bf16.msra.mxu0 0
    %863 = vmatprep.subr.bf16.mxu0 0
    %864 = vmatpush1.bf16.msra.mxu0 0
    %865 = vmatprep.subr.bf16.mxu0 0
    %866 = vmatpush1.bf16.msra.mxu0 0
    %867 = vmatprep.subr.bf16.mxu0 0
    %868 = vmatpush1.bf16.msra.mxu0 0
    %869 = vmatprep.subr.bf16.mxu0 0
    %870 = vmatpush1.bf16.msra.mxu0 0
    %871 = vmatprep.mubr.bf16.mxu0 0
    %872 = vmatmul.mubr.bf16.gmra.mrb[0].mxu0 %v837
    %v873 = vpop.f32.mrb[0].mxu0
    %v874 = vadd.f32 0.0, %v873
    %v875 = vpop.f32.mrb[0].mxu0
    %v876 = vpop.f32.mrb[0].mxu0
    %v877 = vadd.f32 0.0, %v876
    %v878 = vpop.f32.mrb[0].mxu0
    %879 = vdwg.mxu0
    %v882 = vunpack.c.l.b16 %v705
    %v883 = vunpack.c.l.b16 %v706
    %v884 = vpack.c.b16 %v883, %v882
    %v887 = vsel %vm586, %v704, 0
    %889 = vmatprep.subr.bf16.mxu0 0
    %890 = vmatpush1.bf16.msra.mxu0 %v884
    %891 = vmatprep.subr.bf16.mxu0 0
    %892 = vmatpush1.bf16.msra.mxu0 0
    %893 = vmatprep.subr.bf16.mxu0 0
    %894 = vmatpush1.bf16.msra.mxu0 0
    %895 = vmatprep.subr.bf16.mxu0 0
    %896 = vmatpush1.bf16.msra.mxu0 0
    %897 = vmatprep.subr.bf16.mxu0 0
    %898 = vmatpush1.bf16.msra.mxu0 0
    %899 = vmatprep.subr.bf16.mxu0 0
    %900 = vmatpush1.bf16.msra.mxu0 0
    %901 = vmatprep.subr.bf16.mxu0 0
    %902 = vmatpush1.bf16.msra.mxu0 0
    %903 = vmatprep.subr.bf16.mxu0 0
    %904 = vmatpush1.bf16.msra.mxu0 0
    %905 = vmatprep.subr.bf16.mxu0 0
    %906 = vmatpush1.bf16.msra.mxu0 0
    %907 = vmatprep.subr.bf16.mxu0 0
    %908 = vmatpush1.bf16.msra.mxu0 0
    %909 = vmatprep.subr.bf16.mxu0 0
    %910 = vmatpush1.bf16.msra.mxu0 0
    %911 = vmatprep.subr.bf16.mxu0 0
    %912 = vmatpush1.bf16.msra.mxu0 0
    %913 = vmatprep.subr.bf16.mxu0 0
    %914 = vmatpush1.bf16.msra.mxu0 0
    %915 = vmatprep.subr.bf16.mxu0 0
    %916 = vmatpush1.bf16.msra.mxu0 0
    %917 = vmatprep.subr.bf16.mxu0 0
    %918 = vmatpush1.bf16.msra.mxu0 0
    %919 = vmatprep.subr.bf16.mxu0 0
    %920 = vmatpush1.bf16.msra.mxu0 0
    %921 = vmatprep.mubr.bf16.mxu0 0
    %922 = vmatmul.mubr.bf16.gmra.mrb[0].mxu0 %v887
    %v923 = vpop.f32.mrb[0].mxu0
    %v924 = vadd.f32 %v874, %v923
    %v925 = vpop.f32.mrb[0].mxu0
    %v926 = vpop.f32.mrb[0].mxu0
    %v927 = vadd.f32 %v877, %v926
    %v928 = vpop.f32.mrb[0].mxu0
    %929 = vdwg.mxu0
    %v930 = vpack.c.bf16 %v215, %v212
    %v931 = vpack.c.bf16 %v361, %v358
    %v933 = vsel %vm586, %v930, 0
    %v936 = vsel %vm586, %v931, 0
    %938 = vmatprep.subr.bf16.mxu0 0
    %939 = vmatpush1.bf16.xpose.msra.mxu0 %v936
    %940 = vmatprep.subr.bf16.mxu0 0
    %941 = vmatpush1.bf16.xpose.msra.mxu0 0
    %942 = vmatprep.subr.bf16.mxu0 0
    %943 = vmatpush1.bf16.xpose.msra.mxu0 0
    %944 = vmatprep.subr.bf16.mxu0 0
    %945 = vmatpush1.bf16.xpose.msra.mxu0 0
    %946 = vmatprep.subr.bf16.mxu0 0
    %947 = vmatpush1.bf16.xpose.msra.mxu0 0
    %948 = vmatprep.subr.bf16.mxu0 0
    %949 = vmatpush1.bf16.xpose.msra.mxu0 0
    %950 = vmatprep.subr.bf16.mxu0 0
    %951 = vmatpush1.bf16.xpose.msra.mxu0 0
    %952 = vmatprep.subr.bf16.mxu0 0
    %953 = vmatpush1.bf16.xpose.msra.mxu0 0
    %954 = vmatprep.subr.bf16.mxu0 0
    %955 = vmatpush1.bf16.xpose.msra.mxu0 0
    %956 = vmatprep.subr.bf16.mxu0 0
    %957 = vmatpush1.bf16.xpose.msra.mxu0 0
    %958 = vmatprep.subr.bf16.mxu0 0
    %959 = vmatpush1.bf16.xpose.msra.mxu0 0
    %960 = vmatprep.subr.bf16.mxu0 0
    %961 = vmatpush1.bf16.xpose.msra.mxu0 0
    %962 = vmatprep.subr.bf16.mxu0 0
    %963 = vmatpush1.bf16.xpose.msra.mxu0 0
    %964 = vmatprep.subr.bf16.mxu0 0
    %965 = vmatpush1.bf16.xpose.msra.mxu0 0
    %966 = vmatprep.subr.bf16.mxu0 0
    %967 = vmatpush1.bf16.xpose.msra.mxu0 0
    %968 = vmatprep.subr.bf16.mxu0 0
    %969 = vmatpush1.bf16.xpose.msra.mxu0 0
    %970 = vmatprep.mubr.bf16.mxu0 0
    %971 = vmatmul.mubr.bf16.gmra.mrb[0].mxu0 %v933
    %v972 = vpop.f32.mrb[0].mxu0
    %v973 = vadd.f32 0.0, %v972
    %v974 = vpop.f32.mrb[0].mxu0
    %v975 = vpop.f32.mrb[0].mxu0
    %v976 = vadd.f32 0.0, %v975
    %v977 = vpop.f32.mrb[0].mxu0
    %978 = vdwg.mxu0
    %v979 = vmul.f32 %v973, 0.25
    %v980 = vmul.f32 %v976, 0.25
    %v981 = vsel %vm586, %v979, -inf
    %982 = vmax.xlane.f32.xlu0 %v981
    %v983 = vpop.xlane.xlu0 %982
    %v984 = vsel %vm586, %v980, -inf
    %985 = vmax.xlane.f32.xlu0 %v984
    %v986 = vpop.xlane.xlu0 %985
    %v987 = vsub.f32 %v979, %v983
    %v988 = vsub.f32 %v980, %v986
    %v989 = vmul.f32 %v987, 1.442695
    %v990 = vpow.pop %v989
    %v991 = vmul.f32 %v988, 1.442695
    %v992 = vpow.pop %v991
    %v993 = vsel %vm586, %v990, 0.0
    %994 = vadd.xlane.f32.xlu0 %v993
    %v995 = vpop.xlane.xlu0 %994
    %v996 = vsel %vm586, %v992, 0.0
    %997 = vadd.xlane.f32.xlu0 %v996
    %v998 = vpop.xlane.xlu0 %997
    %v999 = vrcp.pop %v995
    %v1000 = vrcp.pop %v998
    %v1001 = vmul.f32 %v990, %v999
    %v1002 = vmul.f32 %v992, %v1000
    %v1003 = vpack.c.bf16 %v1002, %v1001
    %v1004 = vpack.c.bf16 %v507, %v504
    %v1006 = vsel %vm586, %v1003, 0
    %1008 = vmatprep.subr.bf16.mxu0 0
    %1009 = vmatpush1.bf16.msra.mxu0 %v1004
    %1010 = vmatprep.subr.bf16.mxu0 0
    %1011 = vmatpush1.bf16.msra.mxu0 0
    %1012 = vmatprep.subr.bf16.mxu0 0
    %1013 = vmatpush1.bf16.msra.mxu0 0
    %1014 = vmatprep.subr.bf16.mxu0 0
    %1015 = vmatpush1.bf16.msra.mxu0 0
    %1016 = vmatprep.subr.bf16.mxu0 0
    %1017 = vmatpush1.bf16.msra.mxu0 0
    %1018 = vmatprep.subr.bf16.mxu0 0
    %1019 = vmatpush1.bf16.msra.mxu0 0
    %1020 = vmatprep.subr.bf16.mxu0 0
    %1021 = vmatpush1.bf16.msra.mxu0 0
    %1022 = vmatprep.subr.bf16.mxu0 0
    %1023 = vmatpush1.bf16.msra.mxu0 0
    %1024 = vmatprep.subr.bf16.mxu0 0
    %1025 = vmatpush1.bf16.msra.mxu0 0
    %1026 = vmatprep.subr.bf16.mxu0 0
    %1027 = vmatpush1.bf16.msra.mxu0 0
    %1028 = vmatprep.subr.bf16.mxu0 0
    %1029 = vmatpush1.bf16.msra.mxu0 0
    %1030 = vmatprep.subr.bf16.mxu0 0
    %1031 = vmatpush1.bf16.msra.mxu0 0
    %1032 = vmatprep.subr.bf16.mxu0 0
    %1033 = vmatpush1.bf16.msra.mxu0 0
    %1034 = vmatprep.subr.bf16.mxu0 0
    %1035 = vmatpush1.bf16.msra.mxu0 0
    %1036 = vmatprep.subr.bf16.mxu0 0
    %1037 = vmatpush1.bf16.msra.mxu0 0
    %1038 = vmatprep.subr.bf16.mxu0 0
    %1039 = vmatpush1.bf16.msra.mxu0 0
    %1040 = vmatprep.mubr.bf16.mxu0 0
    %1041 = vmatmul.mubr.bf16.gmra.mrb[0].mxu0 %v1006
    %v1042 = vpop.f32.mrb[0].mxu0
    %v1043 = vadd.f32 0.0, %v1042
    %v1044 = vpop.f32.mrb[0].mxu0
    %v1045 = vpop.f32.mrb[0].mxu0
    %v1046 = vadd.f32 0.0, %v1045
    %v1047 = vpop.f32.mrb[0].mxu0
    %1048 = vdwg.mxu0
    %v1049 = vpack.c.bf16 %v1046, %v1043
    %v1050 = vld [vmem:[%s9] sm:$0xf]
    %v1051 = vld [vmem:[%s9 + $0x4] sm:$0xf]
    %v1052 = vpack.c.bf16 %v289, %v286
    %v1053 = vpack.c.bf16 %v435, %v432
    %v1055 = vsel %vm586, %v1052, 0
    %v1058 = vsel %vm586, %v1053, 0
    %1060 = vmatprep.subr.bf16.mxu0 0
    %1061 = vmatpush1.bf16.xpose.msra.mxu0 %v1058
    %1062 = vmatprep.subr.bf16.mxu0 0
    %1063 = vmatpush1.bf16.xpose.msra.mxu0 0
    %1064 = vmatprep.subr.bf16.mxu0 0
    %1065 = vmatpush1.bf16.xpose.msra.mxu0 0
    %1066 = vmatprep.subr.bf16.mxu0 0
    %1067 = vmatpush1.bf16.xpose.msra.mxu0 0
    %1068 = vmatprep.subr.bf16.mxu0 0
    %1069 = vmatpush1.bf16.xpose.msra.mxu0 0
    %1070 = vmatprep.subr.bf16.mxu0 0
    %1071 = vmatpush1.bf16.xpose.msra.mxu0 0
    %1072 = vmatprep.subr.bf16.mxu0 0
    %1073 = vmatpush1.bf16.xpose.msra.mxu0 0
    %1074 = vmatprep.subr.bf16.mxu0 0
    %1075 = vmatpush1.bf16.xpose.msra.mxu0 0
    %1076 = vmatprep.subr.bf16.mxu0 0
    %1077 = vmatpush1.bf16.xpose.msra.mxu0 0
    %1078 = vmatprep.subr.bf16.mxu0 0
    %1079 = vmatpush1.bf16.xpose.msra.mxu0 0
    %1080 = vmatprep.subr.bf16.mxu0 0
    %1081 = vmatpush1.bf16.xpose.msra.mxu0 0
    %1082 = vmatprep.subr.bf16.mxu0 0
    %1083 = vmatpush1.bf16.xpose.msra.mxu0 0
    %1084 = vmatprep.subr.bf16.mxu0 0
    %1085 = vmatpush1.bf16.xpose.msra.mxu0 0
    %1086 = vmatprep.subr.bf16.mxu0 0
    %1087 = vmatpush1.bf16.xpose.msra.mxu0 0
    %1088 = vmatprep.subr.bf16.mxu0 0
    %1089 = vmatpush1.bf16.xpose.msra.mxu0 0
    %1090 = vmatprep.subr.bf16.mxu0 0
    %1091 = vmatpush1.bf16.xpose.msra.mxu0 0
    %1092 = vmatprep.mubr.bf16.mxu0 0
    %1093 = vmatmul.mubr.bf16.gmra.mrb[0].mxu0 %v1055
    %v1094 = vpop.f32.mrb[0].mxu0
    %v1095 = vadd.f32 0.0, %v1094
    %v1096 = vpop.f32.mrb[0].mxu0
    %v1097 = vpop.f32.mrb[0].mxu0
    %v1098 = vadd.f32 0.0, %v1097
    %v1099 = vpop.f32.mrb[0].mxu0
    %1100 = vdwg.mxu0
    %v1101 = vmul.f32 %v1095, 0.25
    %v1102 = vmul.f32 %v1098, 0.25
    %v1103 = vsel %vm586, %v1101, -inf
    %1104 = vmax.xlane.f32.xlu0 %v1103
    %v1105 = vpop.xlane.xlu0 %1104
    %v1106 = vsel %vm586, %v1102, -inf
    %1107 = vmax.xlane.f32.xlu0 %v1106
    %v1108 = vpop.xlane.xlu0 %1107
    %v1109 = vsub.f32 %v1101, %v1105
    %v1110 = vsub.f32 %v1102, %v1108
    %v1111 = vmul.f32 %v1109, 1.442695
    %v1112 = vpow.pop %v1111
    %v1113 = vmul.f32 %v1110, 1.442695
    %v1114 = vpow.pop %v1113
    %v1115 = vsel %vm586, %v1112, 0.0
    %1116 = vadd.xlane.f32.xlu0 %v1115
    %v1117 = vpop.xlane.xlu0 %1116
    %v1118 = vsel %vm586, %v1114, 0.0
    %1119 = vadd.xlane.f32.xlu0 %v1118
    %v1120 = vpop.xlane.xlu0 %1119
    %v1121 = vrcp.pop %v1117
    %v1122 = vrcp.pop %v1120
    %v1123 = vmul.f32 %v1112, %v1121
    %v1124 = vmul.f32 %v1114, %v1122
    %v1125 = vpack.c.bf16 %v1124, %v1123
    %v1126 = vpack.c.bf16 %v581, %v578
    %v1128 = vsel %vm586, %v1125, 0
    %1130 = vmatprep.subr.bf16.mxu0 0
    %1131 = vmatpush1.bf16.msra.mxu0 %v1126
    %1132 = vmatprep.subr.bf16.mxu0 0
    %1133 = vmatpush1.bf16.msra.mxu0 0
    %1134 = vmatprep.subr.bf16.mxu0 0
    %1135 = vmatpush1.bf16.msra.mxu0 0
    %1136 = vmatprep.subr.bf16.mxu0 0
    %1137 = vmatpush1.bf16.msra.mxu0 0
    %1138 = vmatprep.subr.bf16.mxu0 0
    %1139 = vmatpush1.bf16.msra.mxu0 0
    %1140 = vmatprep.subr.bf16.mxu0 0
    %1141 = vmatpush1.bf16.msra.mxu0 0
    %1142 = vmatprep.subr.bf16.mxu0 0
    %1143 = vmatpush1.bf16.msra.mxu0 0
    %1144 = vmatprep.subr.bf16.mxu0 0
    %1145 = vmatpush1.bf16.msra.mxu0 0
    %1146 = vmatprep.subr.bf16.mxu0 0
    %1147 = vmatpush1.bf16.msra.mxu0 0
    %1148 = vmatprep.subr.bf16.mxu0 0
    %1149 = vmatpush1.bf16.msra.mxu0 0
    %1150 = vmatprep.subr.bf16.mxu0 0
    %1151 = vmatpush1.bf16.msra.mxu0 0
    %1152 = vmatprep.subr.bf16.mxu0 0
    %1153 = vmatpush1.bf16.msra.mxu0 0
    %1154 = vmatprep.subr.bf16.mxu0 0
    %1155 = vmatpush1.bf16.msra.mxu0 0
    %1156 = vmatprep.subr.bf16.mxu0 0
    %1157 = vmatpush1.bf16.msra.mxu0 0
    %1158 = vmatprep.subr.bf16.mxu0 0
    %1159 = vmatpush1.bf16.msra.mxu0 0
    %1160 = vmatprep.subr.bf16.mxu0 0
    %1161 = vmatpush1.bf16.msra.mxu0 0
    %1162 = vmatprep.mubr.bf16.mxu0 0
    %1163 = vmatmul.mubr.bf16.gmra.mrb[0].mxu0 %v1128
    %v1164 = vpop.f32.mrb[0].mxu0
    %v1165 = vadd.f32 0.0, %v1164
    %v1166 = vpop.f32.mrb[0].mxu0
    %v1167 = vpop.f32.mrb[0].mxu0
    %v1168 = vadd.f32 0.0, %v1167
    %v1169 = vpop.f32.mrb[0].mxu0
    %1170 = vdwg.mxu0
    %v1171 = vpack.c.bf16 %v1168, %v1165
    %v1172 = vld [vmem:[%s827] sm:$0xf]
    %v1173 = vld [vmem:[%s827 + $0x4] sm:$0xf]
    %v1176 = vunpack.c.l.b16 %v1172
    %v1177 = vunpack.c.l.b16 %v1173
    %v1178 = vpack.c.b16 %v1177, %v1176
    %v1181 = vsel %vm586, %v1171, 0
    %1183 = vmatprep.subr.bf16.mxu0 0
    %1184 = vmatpush1.bf16.msra.mxu0 %v1178
    %1185 = vmatprep.subr.bf16.mxu0 0
    %1186 = vmatpush1.bf16.msra.mxu0 0
    %1187 = vmatprep.subr.bf16.mxu0 0
    %1188 = vmatpush1.bf16.msra.mxu0 0
    %1189 = vmatprep.subr.bf16.mxu0 0
    %1190 = vmatpush1.bf16.msra.mxu0 0
    %1191 = vmatprep.subr.bf16.mxu0 0
    %1192 = vmatpush1.bf16.msra.mxu0 0
    %1193 = vmatprep.subr.bf16.mxu0 0
    %1194 = vmatpush1.bf16.msra.mxu0 0
    %1195 = vmatprep.subr.bf16.mxu0 0
    %1196 = vmatpush1.bf16.msra.mxu0 0
    %1197 = vmatprep.subr.bf16.mxu0 0
    %1198 = vmatpush1.bf16.msra.mxu0 0
    %1199 = vmatprep.subr.bf16.mxu0 0
    %1200 = vmatpush1.bf16.msra.mxu0 0
    %1201 = vmatprep.subr.bf16.mxu0 0
    %1202 = vmatpush1.bf16.msra.mxu0 0
    %1203 = vmatprep.subr.bf16.mxu0 0
    %1204 = vmatpush1.bf16.msra.mxu0 0
    %1205 = vmatprep.subr.bf16.mxu0 0
    %1206 = vmatpush1.bf16.msra.mxu0 0
    %1207 = vmatprep.subr.bf16.mxu0 0
    %1208 = vmatpush1.bf16.msra.mxu0 0
    %1209 = vmatprep.subr.bf16.mxu0 0
    %1210 = vmatpush1.bf16.msra.mxu0 0
    %1211 = vmatprep.subr.bf16.mxu0 0
    %1212 = vmatpush1.bf16.msra.mxu0 0
    %1213 = vmatprep.subr.bf16.mxu0 0
    %1214 = vmatpush1.bf16.msra.mxu0 0
    %1215 = vmatprep.mubr.bf16.mxu0 0
    %1216 = vmatmul.mubr.bf16.gmra.mrb[0].mxu0 %v1181
    %v1217 = vpop.f32.mrb[0].mxu0
    %v1218 = vadd.f32 0.0, %v1217
    %v1219 = vpop.f32.mrb[0].mxu0
    %v1220 = vpop.f32.mrb[0].mxu0
    %v1221 = vadd.f32 0.0, %v1220
    %v1222 = vpop.f32.mrb[0].mxu0
    %1223 = vdwg.mxu0
    %v1226 = vunpack.c.l.b16 %v1050
    %v1227 = vunpack.c.l.b16 %v1051
    %v1228 = vpack.c.b16 %v1227, %v1226
    %v1231 = vsel %vm586, %v1049, 0
    %1233 = vmatprep.subr.bf16.mxu0 0
    %1234 = vmatpush1.bf16.msra.mxu0 %v1228
    %1235 = vmatprep.subr.bf16.mxu0 0
    %1236 = vmatpush1.bf16.msra.mxu0 0
    %1237 = vmatprep.subr.bf16.mxu0 0
    %1238 = vmatpush1.bf16.msra.mxu0 0
    %1239 = vmatprep.subr.bf16.mxu0 0
    %1240 = vmatpush1.bf16.msra.mxu0 0
    %1241 = vmatprep.subr.bf16.mxu0 0
    %1242 = vmatpush1.bf16.msra.mxu0 0
    %1243 = vmatprep.subr.bf16.mxu0 0
    %1244 = vmatpush1.bf16.msra.mxu0 0
    %1245 = vmatprep.subr.bf16.mxu0 0
    %1246 = vmatpush1.bf16.msra.mxu0 0
    %1247 = vmatprep.subr.bf16.mxu0 0
    %1248 = vmatpush1.bf16.msra.mxu0 0
    %1249 = vmatprep.subr.bf16.mxu0 0
    %1250 = vmatpush1.bf16.msra.mxu0 0
    %1251 = vmatprep.subr.bf16.mxu0 0
    %1252 = vmatpush1.bf16.msra.mxu0 0
    %1253 = vmatprep.subr.bf16.mxu0 0
    %1254 = vmatpush1.bf16.msra.mxu0 0
    %1255 = vmatprep.subr.bf16.mxu0 0
    %1256 = vmatpush1.bf16.msra.mxu0 0
    %1257 = vmatprep.subr.bf16.mxu0 0
    %1258 = vmatpush1.bf16.msra.mxu0 0
    %1259 = vmatprep.subr.bf16.mxu0 0
    %1260 = vmatpush1.bf16.msra.mxu0 0
    %1261 = vmatprep.subr.bf16.mxu0 0
    %1262 = vmatpush1.bf16.msra.mxu0 0
    %1263 = vmatprep.subr.bf16.mxu0 0
    %1264 = vmatpush1.bf16.msra.mxu0 0
    %1265 = vmatprep.mubr.bf16.mxu0 0
    %1266 = vmatmul.mubr.bf16.gmra.mrb[0].mxu0 %v1231
    %v1267 = vpop.f32.mrb[0].mxu0
    %v1268 = vadd.f32 %v1218, %v1267
    %v1269 = vpop.f32.mrb[0].mxu0
    %v1270 = vpop.f32.mrb[0].mxu0
    %v1271 = vadd.f32 %v1221, %v1270
    %v1272 = vpop.f32.mrb[0].mxu0
    %1273 = vdwg.mxu0
    %v1274 = vld [vmem:[%s10] sm:$0x1]
    %v1276 = vlaneseq
    %v1277 = vshrl.u32 %v1276, 7
    %v1278 = vsub.s32 0, %v1277
    %v1279 = vrot.slane %v1274, %v1278
    %v1281 = vadd.f32 %v924, %v1279
    %v1282 = vadd.f32 %v927, %v1279
    %v1283 = vadd.f32 %v1268, %v1279
    %v1284 = vadd.f32 %v1271, %v1279
    %v1285 = vadd.f32 %v58, %v1281
    %v1286 = vadd.f32 %v59, %v1282
    %v1287 = vadd.f32 %v60, %v1283
    %v1288 = vadd.f32 %v61, %v1284
    %v1289 = vld [vmem:[%s11] sm:$0x1]
    %v1290 = vld [vmem:[%s12] sm:$0x1]
    %v1291 = vsel %vm64, %v1285, 0.0
    %1292 = vadd.xlane.f32.xlu0 %v1291
    %v1293 = vpop.xlane.xlu0 %1292
    %v1294 = vsel %vm64, %v1286, 0.0
    %1295 = vadd.xlane.f32.xlu0 %v1294
    %v1296 = vpop.xlane.xlu0 %1295
    %v1297 = vsel %vm64, %v1287, 0.0
    %1298 = vadd.xlane.f32.xlu0 %v1297
    %v1299 = vpop.xlane.xlu0 %1298
    %v1300 = vsel %vm64, %v1288, 0.0
    %1301 = vadd.xlane.f32.xlu0 %v1300
    %v1302 = vpop.xlane.xlu0 %1301
    %v1303 = vmul.f32 %v1293, %v77
    %v1304 = vmul.f32 %v1296, %v77
    %v1305 = vmul.f32 %v1299, %v77
    %v1306 = vmul.f32 %v1302, %v77
    %v1307 = vsub.f32 %v1285, %v1303
    %v1308 = vsub.f32 %v1286, %v1304
    %v1309 = vsub.f32 %v1287, %v1305
    %v1310 = vsub.f32 %v1288, %v1306
    %v1311 = vmul.f32 %v1307, %v1307
    %v1312 = vmul.f32 %v1308, %v1308
    %v1313 = vmul.f32 %v1309, %v1309
    %v1314 = vmul.f32 %v1310, %v1310
    %v1315 = vsel %vm64, %v1311, 0.0
    %1316 = vadd.xlane.f32.xlu0 %v1315
    %v1317 = vpop.xlane.xlu0 %1316
    %v1318 = vsel %vm64, %v1312, 0.0
    %1319 = vadd.xlane.f32.xlu0 %v1318
    %v1320 = vpop.xlane.xlu0 %1319
    %v1321 = vsel %vm64, %v1313, 0.0
    %1322 = vadd.xlane.f32.xlu0 %v1321
    %v1323 = vpop.xlane.xlu0 %1322
    %v1324 = vsel %vm64, %v1314, 0.0
    %1325 = vadd.xlane.f32.xlu0 %v1324
    %v1326 = vpop.xlane.xlu0 %1325
    %v1327 = vmul.f32 %v1317, %v77
    %v1328 = vmul.f32 %v1320, %v77
    %v1329 = vmul.f32 %v1323, %v77
    %v1330 = vmul.f32 %v1326, %v77
    %v1331 = vadd.f32 %v1327, 1e-05
    %v1332 = vadd.f32 %v1328, 1e-05
    %v1333 = vadd.f32 %v1329, 1e-05
    %v1334 = vadd.f32 %v1330, 1e-05
    %v1335 = vrsqrt.pop %v1331
    %v1336 = vrsqrt.pop %v1332
    %v1337 = vrsqrt.pop %v1333
    %v1338 = vrsqrt.pop %v1334
    %v1339 = vmul.f32 %v1307, %v1335
    %v1340 = vmul.f32 %v1308, %v1336
    %v1341 = vmul.f32 %v1309, %v1337
    %v1342 = vmul.f32 %v1310, %v1338
    %v1344 = vlaneseq
    %v1345 = vshrl.u32 %v1344, 7
    %v1346 = vsub.s32 0, %v1345
    %v1347 = vrot.slane %v1289, %v1346
    %v1349 = vmul.f32 %v1339, %v1347
    %v1350 = vmul.f32 %v1340, %v1347
    %v1351 = vmul.f32 %v1341, %v1347
    %v1352 = vmul.f32 %v1342, %v1347
    %v1354 = vlaneseq
    %v1355 = vshrl.u32 %v1354, 7
    %v1356 = vsub.s32 0, %v1355
    %v1357 = vrot.slane %v1290, %v1356
    %v1359 = vadd.f32 %v1349, %v1357
    %v1360 = vadd.f32 %v1350, %v1357
    %v1361 = vadd.f32 %v1351, %v1357
    %v1362 = vadd.f32 %v1352, %v1357
    %v1363 = vpack.c.bf16 %v1360, %v1359
    %v1364 = vpack.c.bf16 %v1362, %v1361
    %v1365 = vld [vmem:[%s13] sm:$0xf]
    %v1366 = vld [vmem:[%s13 + $0x4] sm:$0xf]
    %v1367 = vld [vmem:[%s13 + $0x8] sm:$0xf]
    %v1368 = vld [vmem:[%s13 + $0xc] sm:$0xf]
    %v1369 = vld [vmem:[%s14] sm:$0x1]
    %v1371 = vlaneseq
    %v1372 = vshrl.u32 %v1371, 7
    %v1373 = vsub.s32 0, %v1372
    %v1374 = vrot.slane %v1369, %v1373
    %v1380 = vunpack.c.l.b16 %v1365
    %v1381 = vunpack.c.l.b16 %v1366
    %v1382 = vunpack.c.l.b16 %v1367
    %v1383 = vunpack.c.l.b16 %v1368
    %v1384 = vpack.c.b16 %v1381, %v1380
    %v1385 = vpack.c.b16 %v1383, %v1382
    %v1389 = vsel %vm64, %v1363, 0
    %v1392 = vsel %vm64, %v1364, 0
    %1394 = vmatprep.subr.bf16.mxu0 0
    %1395 = vmatpush1.bf16.msra.mxu0 %v1384
    %1396 = vmatprep.subr.bf16.mxu0 0
    %1397 = vmatpush1.bf16.msra.mxu0 %v1385
    %1398 = vmatprep.subr.bf16.mxu0 0
    %1399 = vmatpush1.bf16.msra.mxu0 0
    %1400 = vmatprep.subr.bf16.mxu0 0
    %1401 = vmatpush1.bf16.msra.mxu0 0
    %1402 = vmatprep.subr.bf16.mxu0 0
    %1403 = vmatpush1.bf16.msra.mxu0 0
    %1404 = vmatprep.subr.bf16.mxu0 0
    %1405 = vmatpush1.bf16.msra.mxu0 0
    %1406 = vmatprep.subr.bf16.mxu0 0
    %1407 = vmatpush1.bf16.msra.mxu0 0
    %1408 = vmatprep.subr.bf16.mxu0 0
    %1409 = vmatpush1.bf16.msra.mxu0 0
    %1410 = vmatprep.subr.bf16.mxu0 0
    %1411 = vmatpush1.bf16.msra.mxu0 0
    %1412 = vmatprep.subr.bf16.mxu0 0
    %1413 = vmatpush1.bf16.msra.mxu0 0
    %1414 = vmatprep.subr.bf16.mxu0 0
    %1415 = vmatpush1.bf16.msra.mxu0 0
    %1416 = vmatprep.subr.bf16.mxu0 0
    %1417 = vmatpush1.bf16.msra.mxu0 0
    %1418 = vmatprep.subr.bf16.mxu0 0
    %1419 = vmatpush1.bf16.msra.mxu0 0
    %1420 = vmatprep.subr.bf16.mxu0 0
    %1421 = vmatpush1.bf16.msra.mxu0 0
    %1422 = vmatprep.subr.bf16.mxu0 0
    %1423 = vmatpush1.bf16.msra.mxu0 0
    %1424 = vmatprep.subr.bf16.mxu0 0
    %1425 = vmatpush1.bf16.msra.mxu0 0
    %1426 = vmatprep.mubr.bf16.mxu0 0
    %1427 = vmatmul.mubr.bf16.gmra.mrb[0].mxu0 %v1389
    %v1428 = vpop.f32.mrb[0].mxu0
    %v1429 = vadd.f32 %v1374, %v1428
    %v1430 = vpop.f32.mrb[0].mxu0
    %v1431 = vpop.f32.mrb[0].mxu0
    %v1432 = vadd.f32 %v1374, %v1431
    %v1433 = vpop.f32.mrb[0].mxu0
    %1434 = vmatprep.mubr.bf16.mxu0 0
    %1435 = vmatmul.mubr.bf16.gmra.mrb[0].mxu0 %v1392
    %v1436 = vpop.f32.mrb[0].mxu0
    %v1437 = vadd.f32 %v1374, %v1436
    %v1438 = vpop.f32.mrb[0].mxu0
    %v1439 = vpop.f32.mrb[0].mxu0
    %v1440 = vadd.f32 %v1374, %v1439
    %v1441 = vpop.f32.mrb[0].mxu0
    %1442 = vdwg.mxu0
    %v1443 = vmul.f32 %v1429, 0.5
    %v1444 = vmul.f32 %v1432, 0.5
    %v1445 = vmul.f32 %v1437, 0.5
    %v1446 = vmul.f32 %v1440, 0.5
    %v1447 = vmul.f32 %v1429, 0.044715
    %v1448 = vmul.f32 %v1432, 0.044715
    %v1449 = vmul.f32 %v1437, 0.044715
    %v1450 = vmul.f32 %v1440, 0.044715
    %v1451 = vmul.f32 %v1447, %v1429
    %v1452 = vmul.f32 %v1448, %v1432
    %v1453 = vmul.f32 %v1449, %v1437
    %v1454 = vmul.f32 %v1450, %v1440
    %v1455 = vmul.f32 %v1451, %v1429
    %v1456 = vmul.f32 %v1452, %v1432
    %v1457 = vmul.f32 %v1453, %v1437
    %v1458 = vmul.f32 %v1454, %v1440
    %v1459 = vadd.f32 %v1429, %v1455
    %v1460 = vadd.f32 %v1432, %v1456
    %v1461 = vadd.f32 %v1437, %v1457
    %v1462 = vadd.f32 %v1440, %v1458
    %v1463 = vmul.f32 %v1459, 0.7978846
    %v1464 = vmul.f32 %v1460, 0.7978846
    %v1465 = vmul.f32 %v1461, 0.7978846
    %v1466 = vmul.f32 %v1462, 0.7978846
    %v1467 = vtanh.pop %v1463
    %v1468 = vtanh.pop %v1464
    %v1469 = vtanh.pop %v1465
    %v1470 = vtanh.pop %v1466
    %v1471 = vadd.f32 %v1467, 1.0
    %v1472 = vadd.f32 %v1468, 1.0
    %v1473 = vadd.f32 %v1469, 1.0
    %v1474 = vadd.f32 %v1470, 1.0
    %v1475 = vmul.f32 %v1443, %v1471
    %v1476 = vmul.f32 %v1444, %v1472
    %v1477 = vmul.f32 %v1445, %v1473
    %v1478 = vmul.f32 %v1446, %v1474
    %v1479 = vpack.c.bf16 %v1476, %v1475
    %v1480 = vpack.c.bf16 %v1478, %v1477
    %v1481 = vld [vmem:[%s15] sm:$0xf]
    %v1482 = vld [vmem:[%s15 + $0x4] sm:$0xf]
    %v1483 = vld [vmem:[%s15 + $0x8] sm:$0xf]
    %v1484 = vld [vmem:[%s15 + $0xc] sm:$0xf]
    %v1485 = vld [vmem:[%s15 + $0x10] sm:$0xf]
    %v1486 = vld [vmem:[%s15 + $0x14] sm:$0xf]
    %v1487 = vld [vmem:[%s15 + $0x18] sm:$0xf]
    %v1488 = vld [vmem:[%s15 + $0x1c] sm:$0xf]
    %v1489 = vld [vmem:[%s16] sm:$0x1]
    %v1491 = vlaneseq
    %v1492 = vshrl.u32 %v1491, 7
    %v1493 = vsub.s32 0, %v1492
    %v1494 = vrot.slane %v1489, %v1493
    %v1504 = vunpack.c.l.b16 %v1481
    %v1505 = vunpack.c.l.b16 %v1482
    %v1506 = vunpack.c.l.b16 %v1483
    %v1507 = vunpack.c.l.b16 %v1484
    %v1508 = vunpack.c.l.b16 %v1485
    %v1509 = vunpack.c.l.b16 %v1486
    %v1510 = vunpack.c.l.b16 %v1487
    %v1511 = vunpack.c.l.b16 %v1488
    %v1512 = vpack.c.b16 %v1505, %v1504
    %v1513 = vpack.c.b16 %v1507, %v1506
    %v1514 = vpack.c.b16 %v1509, %v1508
    %v1515 = vpack.c.b16 %v1511, %v1510
    %vm1520 = vcmask 523264
    %v1522 = vsel %vm1520, %v1479, 0
    %v1525 = vsel %vm1520, %v1480, 0
    %1527 = vmatprep.subr.bf16.mxu0 0
    %1528 = vmatpush1.bf16.msra.mxu0 %v1512
    %1529 = vmatprep.subr.bf16.mxu0 0
    %1530 = vmatpush1.bf16.msra.mxu0 %v1513
    %1531 = vmatprep.subr.bf16.mxu0 0
    %1532 = vmatpush1.bf16.msra.mxu0 %v1514
    %1533 = vmatprep.subr.bf16.mxu0 0
    %1534 = vmatpush1.bf16.msra.mxu0 %v1515
    %1535 = vmatprep.subr.bf16.mxu0 0
    %1536 = vmatpush1.bf16.msra.mxu0 0
    %1537 = vmatprep.subr.bf16.mxu0 0
    %1538 = vmatpush1.bf16.msra.mxu0 0
    %1539 = vmatprep.subr.bf16.mxu0 0
    %1540 = vmatpush1.bf16.msra.mxu0 0
    %1541 = vmatprep.subr.bf16.mxu0 0
    %1542 = vmatpush1.bf16.msra.mxu0 0
    %1543 = vmatprep.subr.bf16.mxu0 0
    %1544 = vmatpush1.bf16.msra.mxu0 0
    %1545 = vmatprep.subr.bf16.mxu0 0
    %1546 = vmatpush1.bf16.msra.mxu0 0
    %1547 = vmatprep.subr.bf16.mxu0 0
    %1548 = vmatpush1.bf16.msra.mxu0 0
    %1549 = vmatprep.subr.bf16.mxu0 0
    %1550 = vmatpush1.bf16.msra.mxu0 0
    %1551 = vmatprep.subr.bf16.mxu0 0
    %1552 = vmatpush1.bf16.msra.mxu0 0
    %1553 = vmatprep.subr.bf16.mxu0 0
    %1554 = vmatpush1.bf16.msra.mxu0 0
    %1555 = vmatprep.subr.bf16.mxu0 0
    %1556 = vmatpush1.bf16.msra.mxu0 0
    %1557 = vmatprep.subr.bf16.mxu0 0
    %1558 = vmatpush1.bf16.msra.mxu0 0
    %1559 = vmatprep.mubr.bf16.mxu0 0
    %1560 = vmatmul.mubr.bf16.gmra.mrb[0].mxu0 %v1522
    %v1561 = vpop.f32.mrb[0].mxu0
    %v1562 = vadd.f32 %v1494, %v1561
    %v1563 = vpop.f32.mrb[0].mxu0
    %v1564 = vpop.f32.mrb[0].mxu0
    %v1565 = vadd.f32 %v1494, %v1564
    %v1566 = vpop.f32.mrb[0].mxu0
    %1567 = vmatprep.mubr.bf16.mxu0 0
    %1568 = vmatmul.mubr.bf16.gmra.mrb[0].mxu0 %v1525
    %v1569 = vpop.f32.mrb[0].mxu0
    %v1570 = vadd.f32 %v1494, %v1569
    %v1571 = vpop.f32.mrb[0].mxu0
    %v1572 = vpop.f32.mrb[0].mxu0
    %v1573 = vadd.f32 %v1494, %v1572
    %v1574 = vpop.f32.mrb[0].mxu0
    %1575 = vdwg.mxu0
    %v1576 = vadd.f32 %v1285, %v1562
    %v1577 = vadd.f32 %v1286, %v1565
    %v1578 = vadd.f32 %v1287, %v1570
    %v1579 = vadd.f32 %v1288, %v1573
    %1580 = vst.msk [vmem:[#allocation2] sm:$0xff] %vm64, %v1576
    %1581 = vst.msk [vmem:[#allocation2 + $0x8] sm:$0xff] %vm64, %v1577
    %1582 = vst.msk [vmem:[#allocation2 + $0x10] sm:$0xff] %vm64, %v1578
    %1583 = vst.msk [vmem:[#allocation2 + $0x18] sm:$0xff] %vm64, %v1579
    // Predicated region
    $region70: #{tpu_custom_call.1} parent=1 // pred_check
      _
    $region71: #{tpu_custom_call.1} parent=1 // pred_check_branch
      %1585 = sbr.rel (0) target = $region73
    $region72: #{tpu_custom_call.1} parent=1 // pred_region
      %s1587 = ssub.s32 512, 512
      %1588 = vsyncadd [#allocation3], %s1587
      %s1589 = sshll.u32 [#allocation2], 4
      %s1590 = int_to_ptr.vmem [resolvable:$true] %s1589
      %1595 = dma.vmem_to_hbm [thread:$0]  %s1590, 512, %s17, [#allocation3], 128, 128, 8
    $region73: #{tpu_custom_call.1} parent=1 // pred_fallthru
      _
    // Predicated region
    $region74: #{tpu_custom_call.1} parent=1 // pred_check
      _
    $region75: #{tpu_custom_call.1} parent=1 // pred_check_branch
      %1597 = sbr.rel (0) target = $region77
    $region76: #{tpu_custom_call.1} parent=1 // pred_region
      %1598 = dma.done [#allocation3], 512
    $region77: #{tpu_custom_call.1} parent=1 // pred_fallthru
      _
    %1599 = vsyncpa [#allocation3], 1

</llo_original>
